<compile_context>
chip_gen: v7x
topology: tpu7x:2x2x1
jax: 0.10.0
libtpu: 0.0.40
codegen_flags: <defaults>
</compile_context>

<pallas_src>
import numpy as np
import jax
import jax.numpy as jnp
from jax.experimental import pallas as pl
from jax.experimental.pallas import tpu as pltpu


def _build_tap_table(wdw, s2, H, W, K, imgs_per_step):
    """Fold BN scale + zero-padding boundary masks into the depthwise taps.

    Returns (K*K, mid, imgs_per_step*H*W) f32: tap t, channel c, lane p holds
    wdw[t, c] * s2[c] if the in-image (di, dj) neighbour of lane p exists, else 0.
    Masks depend only on pos % (H*W), so they also zero cross-image contributions
    when the batch is folded into the lane axis and pltpu.roll wraps around.
    """
    HW = H * W
    P = K // 2
    pos = np.arange(HW)
    hh, ww = pos // W, pos % W
    rows = []
    for i in range(K):
        for j in range(K):
            di, dj = i - P, j - P
            m = np.ones(HW, np.float32)
            if di > 0:
                m *= (hh < H - di)
            elif di < 0:
                m *= (hh >= -di)
            if dj > 0:
                m *= (ww < W - dj)
            elif dj < 0:
                m *= (ww >= -dj)
            rows.append(m)
    mask = np.tile(np.stack(rows), (1, imgs_per_step))        # (K*K, imgs*HW)
    tap = wdw * s2[None, :, :]                                # (K*K, mid, 1)
    return tap * jnp.asarray(mask)[:, None, :]                # (K*K, mid, imgs*HW)


def mobilenetv3_forward(x_nchw, params, kernel_size, batch_chunks=1):
    B, C, H, W = x_nchw.shape
    HW = H * W
    mid = params['w1'].shape[0]
    Cout = params['w3'].shape[0]
    red = params['wfc1'].shape[0]
    assert C == Cout, "only the identity-adapt configuration is implemented"
    assert B % batch_chunks == 0
    Bc = B // batch_chunks           # images handled per grid step
    lanes = Bc * HW                  # lane width of one grid step's slab
    K = kernel_size
    KK = K * K
    P = K // 2

    # Channel-major, batch folded into lanes: (B,C,H,W) -> (C, B*HW).
    x_cm = jnp.transpose(x_nchw.astype(jnp.float32).reshape(B, C, HW),
                         (1, 0, 2)).reshape(C, B * HW)

    # Fold BN scales into the adjacent conv weights (exact up to fp reassociation).
    w1f = params['w1'] * params['s1']                         # (mid, C)
    w3f = params['w3'] * params['s3']                         # (C, mid)
    wm = _build_tap_table(params['wdw'], params['s2'], H, W, K, Bc)
    cols = jnp.stack([params['t1'], params['t2'], params['bfc2']], axis=0)  # (3, mid, 1)
    wfc1, bfc1, wfc2, t3 = params['wfc1'], params['bfc1'], params['wfc2'], params['t3']

    def kernel(x_ref, w1_ref, wm_ref, cols_ref, wfc1_ref, bfc1_ref, wfc2_ref,
               w3_ref, t3_ref, o_ref):
        x = x_ref[...]                                        # (C, lanes) lane-dense
        t1 = cols_ref[0]                                      # (mid, 1) shift columns
        t2 = cols_ref[1]
        bfc2 = cols_ref[2]

        # --- 1x1 expansion conv (BN scale pre-folded) + shift + h_swish ---
        y = jnp.dot(w1_ref[...], x, preferred_element_type=jnp.float32) + t1
        y = y * (jnp.clip(y + 3.0, 0.0, 6.0) * (1.0 / 6.0))

        # --- depthwise KxK conv via lane rolls (XLU) + pre-folded tap*scale*mask ---
        acc = None
        t = 0
        for i in range(K):
            for j in range(K):
                shift = (i - P) * W + (j - P)
                src = y if shift == 0 else pltpu.roll(y, (-shift) % lanes, axis=1)
                term = src * wm_ref[t]                        # (mid, lanes)
                acc = term if acc is None else acc + term
                t += 1
        y = acc + t2                                          # BN shift (scale folded)

        # --- Squeeze-and-Excite (per-image pooled means, batched SE matmuls) ---
        inv_hw = 1.0 / HW
        if Bc == 1:
            m = jnp.sum(y, axis=1, keepdims=True) * inv_hw               # (mid, 1)
        else:
            m = jnp.concatenate(
                [jnp.sum(y[:, b * HW:(b + 1) * HW], axis=1, keepdims=True) * inv_hw
                 for b in range(Bc)], axis=1)                            # (mid, Bc)
        z = jnp.dot(wfc1_ref[...], m, preferred_element_type=jnp.float32) + bfc1_ref[...]
        z = jnp.maximum(z, 0.0)                                          # ReLU
        z = jnp.dot(wfc2_ref[...], z, preferred_element_type=jnp.float32) + bfc2
        gate = jnp.clip(z + 3.0, 0.0, 6.0) * (1.0 / 6.0)                 # h_sigmoid (mid, Bc)
        if Bc == 1:
            y = y * gate
        else:
            y = jnp.concatenate(
                [y[:, b * HW:(b + 1) * HW] * gate[:, b:b + 1] for b in range(Bc)],
                axis=1)

        # --- h_swish ---
        y = y * (jnp.clip(y + 3.0, 0.0, 6.0) * (1.0 / 6.0))

        # --- 1x1 projection conv (BN scale pre-folded) + shift + residual ---
        out = jnp.dot(w3_ref[...], y, preferred_element_type=jnp.float32) + t3_ref[...]
        o_ref[...] = (out + x).astype(o_ref.dtype)

    weights = [w1f, wm, cols, wfc1, bfc1, wfc2, w3f, t3]

    def full_spec(a):
        nd = a.ndim
        return pl.BlockSpec(a.shape, lambda g, _n=nd: (0,) * _n)

    flops = int(B * HW * 2 * (C * mid + mid * KK + mid * C) + B * 4 * mid * red)
    bytes_accessed = int(4 * (2 * B * C * HW + sum(int(w.size) for w in weights)))

    out_cm = pl.pallas_call(
        kernel,
        out_shape=jax.ShapeDtypeStruct((C, B * HW), jnp.float32),
        grid_spec=pltpu.PrefetchScalarGridSpec(
            num_scalar_prefetch=0,
            grid=(batch_chunks,),
            in_specs=[pl.BlockSpec((C, lanes), lambda g: (0, g))]
                     + [full_spec(w) for w in weights],
            out_specs=pl.BlockSpec((C, lanes), lambda g: (0, g)),
        ),
        compiler_params=pltpu.CompilerParams(dimension_semantics=("parallel",)),
        cost_estimate=pl.CostEstimate(flops=flops, transcendentals=0,
                                      bytes_accessed=bytes_accessed),
    )(x_cm, *weights)

    return out_cm.reshape(C, B, HW).transpose(1, 0, 2).reshape(B, C, H, W)


def init_params(key, channels, kernel_size, expansion=4):
    """Deterministic synthetic parameters; BN + conv-bias folded into scale/shift.

    Storage is channel-major:
      w1   (mid, C)        1x1 expansion weight
      wdw  (K*K, mid, 1)   depthwise taps, per-channel columns
      wfc1 (red, mid), wfc2 (mid, red)   SE linears (PyTorch orientation)
      w3   (C, mid)        1x1 projection weight
      BN scale/shift and biases stored as (channels, 1) columns.
    """
    mid = channels * expansion
    red = mid // 4
    eps = 1e-5
    K = kernel_size
    ks = jax.random.split(key, 22)
    u = lambda k, shape: jax.random.uniform(k, shape, jnp.float32, 0.5, 1.5)
    n = lambda k, shape, s=0.1: s * jax.random.normal(k, shape, jnp.float32)

    # conv1 1x1 (PyTorch (mid, C, 1, 1)) -> (mid, C)
    w1 = n(ks[0], (mid, channels)); b1 = n(ks[1], (mid,))
    g1, be1, rm1, rv1 = u(ks[2], (mid,)), n(ks[3], (mid,)), n(ks[4], (mid,)), u(ks[5], (mid,))
    sc1 = g1 / jnp.sqrt(rv1 + eps); sh1 = be1 + (b1 - rm1) * sc1

    # depthwise (PyTorch (mid, 1, K, K)) -> (K*K, mid, 1)
    wdw = n(ks[6], (K * K, mid, 1)); bdw = n(ks[7], (mid,))
    g2, be2, rm2, rv2 = u(ks[8], (mid,)), n(ks[9], (mid,)), n(ks[10], (mid,)), u(ks[11], (mid,))
    sc2 = g2 / jnp.sqrt(rv2 + eps); sh2 = be2 + (bdw - rm2) * sc2

    # SE: Linear(mid, red) weight (red, mid); Linear(red, mid) weight (mid, red)
    wfc1 = n(ks[12], (red, mid)); bfc1 = n(ks[13], (red,))
    wfc2 = n(ks[14], (mid, red)); bfc2 = n(ks[15], (mid,))

    # conv3 1x1 (PyTorch (C, mid, 1, 1)) -> (C, mid)
    w3 = n(ks[16], (channels, mid)); b3 = n(ks[17], (channels,))
    g3, be3, rm3, rv3 = (u(ks[18], (channels,)), n(ks[19], (channels,)),
                         n(ks[20], (channels,)), u(ks[21], (channels,)))
    sc3 = g3 / jnp.sqrt(rv3 + eps); sh3 = be3 + (b3 - rm3) * sc3

    col = lambda v: v.reshape(-1, 1)
    return dict(w1=w1, s1=col(sc1), t1=col(sh1),
                wdw=wdw, s2=col(sc2), t2=col(sh2),
                wfc1=wfc1, bfc1=col(bfc1), wfc2=wfc2, bfc2=col(bfc2),
                w3=w3, s3=col(sc3), t3=col(sh3))


def reference_forward(x_nchw, p, kernel_size):
    """Pure-JAX NCHW reference of the same forward pass, for correctness check."""
    x = x_nchw.astype(jnp.float32)
    B, C, H, W = x.shape
    K = kernel_size; P = K // 2
    hswish = lambda v: v * jnp.clip(v + 3., 0., 6.) / 6.
    ch = lambda v: v.reshape(1, -1, 1, 1)

    y = jnp.einsum('mc,bchw->bmhw', p['w1'], x)
    y = y * ch(p['s1']) + ch(p['t1'])
    y = hswish(y)

    yp = jnp.pad(y, ((0, 0), (0, 0), (P, P), (P, P)))
    acc = jnp.zeros_like(y)
    for i in range(K):
        for j in range(K):
            acc = acc + yp[:, :, i:i + H, j:j + W] * ch(p['wdw'][i * K + j])
    y = acc * ch(p['s2']) + ch(p['t2'])

    m = y.mean(axis=(2, 3))                                     # (B, mid)
    z = jnp.maximum(m @ p['wfc1'].T + p['bfc1'].reshape(-1), 0.)
    z = jnp.clip(z @ p['wfc2'].T + p['bfc2'].reshape(-1) + 3., 0., 6.) / 6.
    y = y * z[:, :, None, None]
    y = hswish(y)

    out = jnp.einsum('cm,bmhw->bchw', p['w3'], y)
    out = out * ch(p['s3']) + ch(p['t3'])
    return out + x


if __name__ == "__main__":
    B, C, H, W = 2, 8, 16, 16       # inchannels == outchannels == 8
    kernel_size = 3
    expansion = 4                    # mid = 32, red = 8

    key = jax.random.PRNGKey(0)
    kx, kp = jax.random.split(key)
    x = jax.random.normal(kx, (B, C, H, W), jnp.float32)
    params = init_params(kp, C, kernel_size, expansion)

    # batch_chunks=1: fully collapsed grid (best on v5e/v6e); use 2 on v7x (2 TCs).
    out = mobilenetv3_forward(x, params, kernel_size, batch_chunks=1)
    out = jax.block_until_ready(out)

    ref = reference_forward(x, params, kernel_size)
    np.testing.assert_allclose(np.asarray(out), np.asarray(ref), rtol=1e-4, atol=1e-4)
    print("KERNEL_OK")
</pallas_src>

<mosaic_0001>
module attributes {stable_mosaic.version = 11 : i64} {
  func.func @kernel(%arg0: i32, %arg1: memref<8x512xf32, #tpu.memory_space<vmem>>, %arg2: memref<32x8xf32, #tpu.memory_space<vmem>>, %arg3: memref<9x32x512xf32, #tpu.memory_space<vmem>>, %arg4: memref<3x32x1xf32, #tpu.memory_space<vmem>>, %arg5: memref<8x32xf32, #tpu.memory_space<vmem>>, %arg6: memref<8x1xf32, #tpu.memory_space<vmem>>, %arg7: memref<32x8xf32, #tpu.memory_space<vmem>>, %arg8: memref<8x32xf32, #tpu.memory_space<vmem>>, %arg9: memref<8x1xf32, #tpu.memory_space<vmem>>, %arg10: memref<8x512xf32, #tpu.memory_space<vmem>>) attributes {dimension_semantics = [#tpu.dimension_semantics<parallel>], iteration_bounds = array<i64: 1>, scalar_prefetch = 0 : i64, scratch_operands = 0 : i64, tpu.core_type = #tpu.core_type<tc>, window_params = [{transform_indices = @transform_0, window_bounds = array<i64: 8, 512>}, {pipeline_mode = #tpu.pipeline_mode<synchronous>, transform_indices = @transform_1, window_bounds = array<i64: 32, 8>}, {pipeline_mode = #tpu.pipeline_mode<synchronous>, transform_indices = @transform_2, window_bounds = array<i64: 9, 32, 512>}, {pipeline_mode = #tpu.pipeline_mode<synchronous>, transform_indices = @transform_3, window_bounds = array<i64: 3, 32, 1>}, {pipeline_mode = #tpu.pipeline_mode<synchronous>, transform_indices = @transform_4, window_bounds = array<i64: 8, 32>}, {pipeline_mode = #tpu.pipeline_mode<synchronous>, transform_indices = @transform_5, window_bounds = array<i64: 8, 1>}, {pipeline_mode = #tpu.pipeline_mode<synchronous>, transform_indices = @transform_6, window_bounds = array<i64: 32, 8>}, {pipeline_mode = #tpu.pipeline_mode<synchronous>, transform_indices = @transform_7, window_bounds = array<i64: 8, 32>}, {pipeline_mode = #tpu.pipeline_mode<synchronous>, transform_indices = @transform_8, window_bounds = array<i64: 8, 1>}, {transform_indices = @transform_9, window_bounds = array<i64: 8, 512>}]} {
    %c0 = arith.constant 0 : index
    %c0_0 = arith.constant 0 : index
    %0 = vector.load %arg1[%c0, %c0_0] : memref<8x512xf32, #tpu.memory_space<vmem>>, vector<8x512xf32>
    %c0_1 = arith.constant 0 : index
    %c0_2 = arith.constant 0 : index
    %c0_3 = arith.constant 0 : index
    %1 = vector.load %arg4[%c0_1, %c0_2, %c0_3] : memref<3x32x1xf32, #tpu.memory_space<vmem>>, vector<1x32x1xf32>
    %2 = vector.shape_cast %1 : vector<1x32x1xf32> to vector<32x1xf32>
    %c1 = arith.constant 1 : index
    %c0_4 = arith.constant 0 : index
    %c0_5 = arith.constant 0 : index
    %3 = vector.load %arg4[%c1, %c0_4, %c0_5] : memref<3x32x1xf32, #tpu.memory_space<vmem>>, vector<1x32x1xf32>
    %4 = vector.shape_cast %3 : vector<1x32x1xf32> to vector<32x1xf32>
    %c2 = arith.constant 2 : index
    %c0_6 = arith.constant 0 : index
    %c0_7 = arith.constant 0 : index
    %5 = vector.load %arg4[%c2, %c0_6, %c0_7] : memref<3x32x1xf32, #tpu.memory_space<vmem>>, vector<1x32x1xf32>
    %6 = vector.shape_cast %5 : vector<1x32x1xf32> to vector<32x1xf32>
    %c0_8 = arith.constant 0 : index
    %c0_9 = arith.constant 0 : index
    %7 = vector.load %arg2[%c0_8, %c0_9] : memref<32x8xf32, #tpu.memory_space<vmem>>, vector<32x8xf32>
    %cst = arith.constant dense<0.000000e+00> : vector<32x512xf32>
    %8 = tpu.matmul %7, %0, %cst {dimension_numbers = #tpu.dot_dimension_numbers<[1], [0], [0], [1], [0, 0, 1, 1], [], []>} : vector<32x8xf32>, vector<8x512xf32>, vector<32x512xf32> -> vector<32x512xf32>
    %9 = vector.broadcast %2 : vector<32x1xf32> to vector<32x512xf32>
    %10 = arith.addf %8, %9 : vector<32x512xf32>
    %cst_10 = arith.constant 3.000000e+00 : f32
    %11 = vector.broadcast %cst_10 : f32 to vector<32x512xf32>
    %12 = arith.addf %10, %11 : vector<32x512xf32>
    %cst_11 = arith.constant 0.000000e+00 : f32
    %cst_12 = arith.constant 6.000000e+00 : f32
    %13 = vector.broadcast %cst_11 : f32 to vector<32x512xf32>
    %14 = arith.maximumf %13, %12 : vector<32x512xf32>
    %15 = vector.broadcast %cst_12 : f32 to vector<32x512xf32>
    %16 = arith.minimumf %15, %14 : vector<32x512xf32>
    %cst_13 = arith.constant 0.166666672 : f32
    %17 = vector.broadcast %cst_13 : f32 to vector<32x512xf32>
    %18 = arith.mulf %16, %17 : vector<32x512xf32>
    %19 = arith.mulf %10, %18 : vector<32x512xf32>
    %c17_i32 = arith.constant 17 : i32
    %20 = tpu.dynamic_rotate %19 by %c17_i32 dim 1 : vector<32x512xf32>, i32 -> vector<32x512xf32>
    %c0_14 = arith.constant 0 : index
    %c0_15 = arith.constant 0 : index
    %c0_16 = arith.constant 0 : index
    %21 = vector.load %arg3[%c0_14, %c0_15, %c0_16] : memref<9x32x512xf32, #tpu.memory_space<vmem>>, vector<1x32x512xf32>
    %22 = vector.shape_cast %21 : vector<1x32x512xf32> to vector<32x512xf32>
    %23 = arith.mulf %20, %22 : vector<32x512xf32>
    %c16_i32 = arith.constant 16 : i32
    %24 = tpu.dynamic_rotate %19 by %c16_i32 dim 1 : vector<32x512xf32>, i32 -> vector<32x512xf32>
    %c1_17 = arith.constant 1 : index
    %c0_18 = arith.constant 0 : index
    %c0_19 = arith.constant 0 : index
    %25 = vector.load %arg3[%c1_17, %c0_18, %c0_19] : memref<9x32x512xf32, #tpu.memory_space<vmem>>, vector<1x32x512xf32>
    %26 = vector.shape_cast %25 : vector<1x32x512xf32> to vector<32x512xf32>
    %27 = arith.mulf %24, %26 : vector<32x512xf32>
    %28 = arith.addf %23, %27 : vector<32x512xf32>
    %c15_i32 = arith.constant 15 : i32
    %29 = tpu.dynamic_rotate %19 by %c15_i32 dim 1 : vector<32x512xf32>, i32 -> vector<32x512xf32>
    %c2_20 = arith.constant 2 : index
    %c0_21 = arith.constant 0 : index
    %c0_22 = arith.constant 0 : index
    %30 = vector.load %arg3[%c2_20, %c0_21, %c0_22] : memref<9x32x512xf32, #tpu.memory_space<vmem>>, vector<1x32x512xf32>
    %31 = vector.shape_cast %30 : vector<1x32x512xf32> to vector<32x512xf32>
    %32 = arith.mulf %29, %31 : vector<32x512xf32>
    %33 = arith.addf %28, %32 : vector<32x512xf32>
    %c1_i32 = arith.constant 1 : i32
    %34 = tpu.dynamic_rotate %19 by %c1_i32 dim 1 : vector<32x512xf32>, i32 -> vector<32x512xf32>
    %c3 = arith.constant 3 : index
    %c0_23 = arith.constant 0 : index
    %c0_24 = arith.constant 0 : index
    %35 = vector.load %arg3[%c3, %c0_23, %c0_24] : memref<9x32x512xf32, #tpu.memory_space<vmem>>, vector<1x32x512xf32>
    %36 = vector.shape_cast %35 : vector<1x32x512xf32> to vector<32x512xf32>
    %37 = arith.mulf %34, %36 : vector<32x512xf32>
    %38 = arith.addf %33, %37 : vector<32x512xf32>
    %c4 = arith.constant 4 : index
    %c0_25 = arith.constant 0 : index
    %c0_26 = arith.constant 0 : index
    %39 = vector.load %arg3[%c4, %c0_25, %c0_26] : memref<9x32x512xf32, #tpu.memory_space<vmem>>, vector<1x32x512xf32>
    %40 = vector.shape_cast %39 : vector<1x32x512xf32> to vector<32x512xf32>
    %41 = arith.mulf %19, %40 : vector<32x512xf32>
    %42 = arith.addf %38, %41 : vector<32x512xf32>
    %c511_i32 = arith.constant 511 : i32
    %43 = tpu.dynamic_rotate %19 by %c511_i32 dim 1 : vector<32x512xf32>, i32 -> vector<32x512xf32>
    %c5 = arith.constant 5 : index
    %c0_27 = arith.constant 0 : index
    %c0_28 = arith.constant 0 : index
    %44 = vector.load %arg3[%c5, %c0_27, %c0_28] : memref<9x32x512xf32, #tpu.memory_space<vmem>>, vector<1x32x512xf32>
    %45 = vector.shape_cast %44 : vector<1x32x512xf32> to vector<32x512xf32>
    %46 = arith.mulf %43, %45 : vector<32x512xf32>
    %47 = arith.addf %42, %46 : vector<32x512xf32>
    %c497_i32 = arith.constant 497 : i32
    %48 = tpu.dynamic_rotate %19 by %c497_i32 dim 1 : vector<32x512xf32>, i32 -> vector<32x512xf32>
    %c6 = arith.constant 6 : index
    %c0_29 = arith.constant 0 : index
    %c0_30 = arith.constant 0 : index
    %49 = vector.load %arg3[%c6, %c0_29, %c0_30] : memref<9x32x512xf32, #tpu.memory_space<vmem>>, vector<1x32x512xf32>
    %50 = vector.shape_cast %49 : vector<1x32x512xf32> to vector<32x512xf32>
    %51 = arith.mulf %48, %50 : vector<32x512xf32>
    %52 = arith.addf %47, %51 : vector<32x512xf32>
    %c496_i32 = arith.constant 496 : i32
    %53 = tpu.dynamic_rotate %19 by %c496_i32 dim 1 : vector<32x512xf32>, i32 -> vector<32x512xf32>
    %c7 = arith.constant 7 : index
    %c0_31 = arith.constant 0 : index
    %c0_32 = arith.constant 0 : index
    %54 = vector.load %arg3[%c7, %c0_31, %c0_32] : memref<9x32x512xf32, #tpu.memory_space<vmem>>, vector<1x32x512xf32>
    %55 = vector.shape_cast %54 : vector<1x32x512xf32> to vector<32x512xf32>
    %56 = arith.mulf %53, %55 : vector<32x512xf32>
    %57 = arith.addf %52, %56 : vector<32x512xf32>
    %c495_i32 = arith.constant 495 : i32
    %58 = tpu.dynamic_rotate %19 by %c495_i32 dim 1 : vector<32x512xf32>, i32 -> vector<32x512xf32>
    %c8 = arith.constant 8 : index
    %c0_33 = arith.constant 0 : index
    %c0_34 = arith.constant 0 : index
    %59 = vector.load %arg3[%c8, %c0_33, %c0_34] : memref<9x32x512xf32, #tpu.memory_space<vmem>>, vector<1x32x512xf32>
    %60 = vector.shape_cast %59 : vector<1x32x512xf32> to vector<32x512xf32>
    %61 = arith.mulf %58, %60 : vector<32x512xf32>
    %62 = arith.addf %57, %61 : vector<32x512xf32>
    %63 = vector.broadcast %4 : vector<32x1xf32> to vector<32x512xf32>
    %64 = arith.addf %62, %63 : vector<32x512xf32>
    %65 = vector.extract_strided_slice %64 {offsets = [0, 0], sizes = [32, 256], strides = [1, 1]} : vector<32x512xf32> to vector<32x256xf32>
    %cst_35 = arith.constant dense<0.000000e+00> : vector<32xf32>
    %66 = vector.multi_reduction <add>, %65, %cst_35 [1] : vector<32x256xf32> to vector<32xf32>
    %67 = vector.shape_cast %66 : vector<32xf32> to vector<32x1xf32>
    %cst_36 = arith.constant 3.906250e-03 : f32
    %68 = vector.broadcast %cst_36 : f32 to vector<32x1xf32>
    %69 = arith.mulf %67, %68 : vector<32x1xf32>
    %70 = vector.extract_strided_slice %64 {offsets = [0, 256], sizes = [32, 256], strides = [1, 1]} : vector<32x512xf32> to vector<32x256xf32>
    %cst_37 = arith.constant dense<0.000000e+00> : vector<32xf32>
    %71 = vector.multi_reduction <add>, %70, %cst_37 [1] : vector<32x256xf32> to vector<32xf32>
    %72 = vector.shape_cast %71 : vector<32xf32> to vector<32x1xf32>
    %cst_38 = arith.constant 3.906250e-03 : f32
    %73 = vector.broadcast %cst_38 : f32 to vector<32x1xf32>
    %74 = arith.mulf %72, %73 : vector<32x1xf32>
    %75 = tpu.concatenate %69, %74 in 1 : vector<32x1xf32>, vector<32x1xf32> -> vector<32x2xf32>
    %c0_39 = arith.constant 0 : index
    %c0_40 = arith.constant 0 : index
    %76 = vector.load %arg5[%c0_39, %c0_40] : memref<8x32xf32, #tpu.memory_space<vmem>>, vector<8x32xf32>
    %cst_41 = arith.constant dense<0.000000e+00> : vector<8x2xf32>
    %77 = tpu.matmul %76, %75, %cst_41 {dimension_numbers = #tpu.dot_dimension_numbers<[1], [0], [0], [1], [0, 0, 1, 1], [], []>} : vector<8x32xf32>, vector<32x2xf32>, vector<8x2xf32> -> vector<8x2xf32>
    %c0_42 = arith.constant 0 : index
    %c0_43 = arith.constant 0 : index
    %78 = vector.load %arg6[%c0_42, %c0_43] : memref<8x1xf32, #tpu.memory_space<vmem>>, vector<8x1xf32>
    %79 = vector.broadcast %78 : vector<8x1xf32> to vector<8x2xf32>
    %80 = arith.addf %77, %79 : vector<8x2xf32>
    %cst_44 = arith.constant 0.000000e+00 : f32
    %81 = vector.broadcast %cst_44 : f32 to vector<8x2xf32>
    %82 = arith.maximumf %80, %81 : vector<8x2xf32>
    %c0_45 = arith.constant 0 : index
    %c0_46 = arith.constant 0 : index
    %83 = vector.load %arg7[%c0_45, %c0_46] : memref<32x8xf32, #tpu.memory_space<vmem>>, vector<32x8xf32>
    %cst_47 = arith.constant dense<0.000000e+00> : vector<32x2xf32>
    %84 = tpu.matmul %83, %82, %cst_47 {dimension_numbers = #tpu.dot_dimension_numbers<[1], [0], [0], [1], [0, 0, 1, 1], [], []>} : vector<32x8xf32>, vector<8x2xf32>, vector<32x2xf32> -> vector<32x2xf32>
    %85 = vector.broadcast %6 : vector<32x1xf32> to vector<32x2xf32>
    %86 = arith.addf %84, %85 : vector<32x2xf32>
    %cst_48 = arith.constant 3.000000e+00 : f32
    %87 = vector.broadcast %cst_48 : f32 to vector<32x2xf32>
    %88 = arith.addf %86, %87 : vector<32x2xf32>
    %cst_49 = arith.constant 0.000000e+00 : f32
    %cst_50 = arith.constant 6.000000e+00 : f32
    %89 = vector.broadcast %cst_49 : f32 to vector<32x2xf32>
    %90 = arith.maximumf %89, %88 : vector<32x2xf32>
    %91 = vector.broadcast %cst_50 : f32 to vector<32x2xf32>
    %92 = arith.minimumf %91, %90 : vector<32x2xf32>
    %cst_51 = arith.constant 0.166666672 : f32
    %93 = vector.broadcast %cst_51 : f32 to vector<32x2xf32>
    %94 = arith.mulf %92, %93 : vector<32x2xf32>
    %95 = vector.extract_strided_slice %64 {offsets = [0, 0], sizes = [32, 256], strides = [1, 1]} : vector<32x512xf32> to vector<32x256xf32>
    %96 = vector.extract_strided_slice %94 {offsets = [0, 0], sizes = [32, 1], strides = [1, 1]} : vector<32x2xf32> to vector<32x1xf32>
    %97 = vector.broadcast %96 : vector<32x1xf32> to vector<32x256xf32>
    %98 = arith.mulf %95, %97 : vector<32x256xf32>
    %99 = vector.extract_strided_slice %64 {offsets = [0, 256], sizes = [32, 256], strides = [1, 1]} : vector<32x512xf32> to vector<32x256xf32>
    %100 = vector.extract_strided_slice %94 {offsets = [0, 1], sizes = [32, 1], strides = [1, 1]} : vector<32x2xf32> to vector<32x1xf32>
    %101 = vector.broadcast %100 : vector<32x1xf32> to vector<32x256xf32>
    %102 = arith.mulf %99, %101 : vector<32x256xf32>
    %103 = tpu.concatenate %98, %102 in 1 : vector<32x256xf32>, vector<32x256xf32> -> vector<32x512xf32>
    %cst_52 = arith.constant 3.000000e+00 : f32
    %104 = vector.broadcast %cst_52 : f32 to vector<32x512xf32>
    %105 = arith.addf %103, %104 : vector<32x512xf32>
    %cst_53 = arith.constant 0.000000e+00 : f32
    %cst_54 = arith.constant 6.000000e+00 : f32
    %106 = vector.broadcast %cst_53 : f32 to vector<32x512xf32>
    %107 = arith.maximumf %106, %105 : vector<32x512xf32>
    %108 = vector.broadcast %cst_54 : f32 to vector<32x512xf32>
    %109 = arith.minimumf %108, %107 : vector<32x512xf32>
    %cst_55 = arith.constant 0.166666672 : f32
    %110 = vector.broadcast %cst_55 : f32 to vector<32x512xf32>
    %111 = arith.mulf %109, %110 : vector<32x512xf32>
    %112 = arith.mulf %103, %111 : vector<32x512xf32>
    %c0_56 = arith.constant 0 : index
    %c0_57 = arith.constant 0 : index
    %113 = vector.load %arg8[%c0_56, %c0_57] : memref<8x32xf32, #tpu.memory_space<vmem>>, vector<8x32xf32>
    %cst_58 = arith.constant dense<0.000000e+00> : vector<8x512xf32>
    %114 = tpu.matmul %113, %112, %cst_58 {dimension_numbers = #tpu.dot_dimension_numbers<[1], [0], [0], [1], [0, 0, 1, 1], [], []>} : vector<8x32xf32>, vector<32x512xf32>, vector<8x512xf32> -> vector<8x512xf32>
    %c0_59 = arith.constant 0 : index
    %c0_60 = arith.constant 0 : index
    %115 = vector.load %arg9[%c0_59, %c0_60] : memref<8x1xf32, #tpu.memory_space<vmem>>, vector<8x1xf32>
    %116 = vector.broadcast %115 : vector<8x1xf32> to vector<8x512xf32>
    %117 = arith.addf %114, %116 : vector<8x512xf32>
    %118 = arith.addf %117, %0 : vector<8x512xf32>
    %c0_61 = arith.constant 0 : index
    %c0_62 = arith.constant 0 : index
    %119 = vector.load %arg10[%c0_61, %c0_62] : memref<8x512xf32, #tpu.memory_space<vmem>>, vector<8x512xf32>
    tpu.vector_store %arg10[%c0_61, %c0_62], %118 {strides = array<i32>} : memref<8x512xf32, #tpu.memory_space<vmem>>, vector<8x512xf32>,
    return
  }
  func.func @transform_0(%arg0: i32) -> (i32, i32) {
    %c0_i32 = arith.constant 0 : i32
    %c0_i32_0 = arith.constant 0 : i32
    return %c0_i32, %arg0 : i32, i32
  }
  func.func @transform_1(%arg0: i32) -> (i32, i32) {
    %c0_i32 = arith.constant 0 : i32
    %c0_i32_0 = arith.constant 0 : i32
    %c0_i32_1 = arith.constant 0 : i32
    return %c0_i32, %c0_i32_0 : i32, i32
  }
  func.func @transform_2(%arg0: i32) -> (i32, i32, i32) {
    %c0_i32 = arith.constant 0 : i32
    %c0_i32_0 = arith.constant 0 : i32
    %c0_i32_1 = arith.constant 0 : i32
    %c0_i32_2 = arith.constant 0 : i32
    return %c0_i32, %c0_i32_0, %c0_i32_1 : i32, i32, i32
  }
  func.func @transform_3(%arg0: i32) -> (i32, i32, i32) {
    %c0_i32 = arith.constant 0 : i32
    %c0_i32_0 = arith.constant 0 : i32
    %c0_i32_1 = arith.constant 0 : i32
    %c0_i32_2 = arith.constant 0 : i32
    return %c0_i32, %c0_i32_0, %c0_i32_1 : i32, i32, i32
  }
  func.func @transform_4(%arg0: i32) -> (i32, i32) {
    %c0_i32 = arith.constant 0 : i32
    %c0_i32_0 = arith.constant 0 : i32
    %c0_i32_1 = arith.constant 0 : i32
    return %c0_i32, %c0_i32_0 : i32, i32
  }
  func.func @transform_5(%arg0: i32) -> (i32, i32) {
    %c0_i32 = arith.constant 0 : i32
    %c0_i32_0 = arith.constant 0 : i32
    %c0_i32_1 = arith.constant 0 : i32
    return %c0_i32, %c0_i32_0 : i32, i32
  }
  func.func @transform_6(%arg0: i32) -> (i32, i32) {
    %c0_i32 = arith.constant 0 : i32
    %c0_i32_0 = arith.constant 0 : i32
    %c0_i32_1 = arith.constant 0 : i32
    return %c0_i32, %c0_i32_0 : i32, i32
  }
  func.func @transform_7(%arg0: i32) -> (i32, i32) {
    %c0_i32 = arith.constant 0 : i32
    %c0_i32_0 = arith.constant 0 : i32
    %c0_i32_1 = arith.constant 0 : i32
    return %c0_i32, %c0_i32_0 : i32, i32
  }
  func.func @transform_8(%arg0: i32) -> (i32, i32) {
    %c0_i32 = arith.constant 0 : i32
    %c0_i32_0 = arith.constant 0 : i32
    %c0_i32_1 = arith.constant 0 : i32
    return %c0_i32, %c0_i32_0 : i32, i32
  }
  func.func @transform_9(%arg0: i32) -> (i32, i32) {
    %c0_i32 = arith.constant 0 : i32
    %c0_i32_0 = arith.constant 0 : i32
    return %c0_i32, %arg0 : i32, i32
  }
}

</mosaic_0001>

<llo_original>
// kernel: tpu_custom_call.1
$region0: #{tpu_custom_call.1}
  #allocation0 [shape = 'u32[]', space=smem, size = 0x4, offset = 0x4, fixed_abs, tag = 'smem constant byte address 0x4 - core index']
  #allocation1 [shape = 'u32[144,128]{1,0:T(1,128)}', space=vmem, size = 0x12000, scoped, tag = 'internal scratch']
  %s0 = inlined_call_operand.vmem [shape: f32[8,512], index: 0, kind: input, shape index: {}]
  %s1 = inlined_call_operand.vmem [shape: f32[32,8], index: 1, kind: input, shape index: {}]
  %s2 = inlined_call_operand.hbm [shape: f32[9,32,512], index: 2, kind: input, shape index: {}]
  %s3 = inlined_call_operand.vmem [shape: f32[3,32,1], index: 3, kind: input, shape index: {}]
  %s4 = inlined_call_operand.vmem [shape: f32[8,32], index: 4, kind: input, shape index: {}]
  %s5 = inlined_call_operand.vmem [shape: f32[8,1], index: 5, kind: input, shape index: {}]
  %s6 = inlined_call_operand.vmem [shape: f32[32,8], index: 6, kind: input, shape index: {}]
  %s7 = inlined_call_operand.vmem [shape: f32[8,32], index: 7, kind: input, shape index: {}]
  %s8 = inlined_call_operand.vmem [shape: f32[8,1], index: 8, kind: input, shape index: {}]
  %s9 = inlined_call_operand.hbm [shape: f32[8,512], index: 9, kind: output, shape index: {}]
  %s10 = sld [smem:[#allocation0]]
  $region50: #{tpu_custom_call.1} parent=0
    _
  %s12 = ssub.s32 1, %s10
  %s13 = scalar_select 0, %s12, %s10
  $region1: #{tpu_custom_call.1} parent=0
    #allocation2 [shape = 'u8[589824]{0}', space=vmem, size = 0x90000, scoped, tag = 'input window, operand 2, single buffered']
    #allocation3 [shape = 's32[1]{0}', space=sflag, size = 0x4, scoped, tag = 'scoped memory for tpu_custom_call.1']
    #allocation4 [shape = 's32[1]{0}', space=sflag, size = 0x4, scoped, tag = 'scoped memory for tpu_custom_call.1']
    #allocation5 [shape = 'u8[16384]{0}', space=vmem, size = 0x4000, scoped, tag = 'output window, operand 0, single buffered']
    %14 = vsyncpa [#allocation3], 0
    %15 = vsyncpa [#allocation4], 0
    // Predicated region
    $region2: #{tpu_custom_call.1} parent=1 // pred_check
      _
    $region3: #{tpu_custom_call.1} parent=1 // pred_check_branch
      %17 = sbr.rel (0) target = $region5
    $region4: #{tpu_custom_call.1} parent=1 // pred_region
      _
    $region5: #{tpu_custom_call.1} parent=1 // pred_fallthru
      _
    // Predicated region
    $region6: #{tpu_custom_call.1} parent=1 // pred_check
      _
    $region7: #{tpu_custom_call.1} parent=1 // pred_check_branch
      %19 = sbr.rel (0) target = $region9
    $region8: #{tpu_custom_call.1} parent=1 // pred_region
      _
    $region9: #{tpu_custom_call.1} parent=1 // pred_fallthru
      _
    // Predicated region
    $region10: #{tpu_custom_call.1} parent=1 // pred_check
      _
    $region11: #{tpu_custom_call.1} parent=1 // pred_check_branch
      %21 = sbr.rel (0) target = $region13
    $region12: #{tpu_custom_call.1} parent=1 // pred_region
      %s23 = ssub.s32 18432, 18432
      %24 = vsyncadd [#allocation3], %s23
      %s25 = sshll.u32 [#allocation2], 4
      %s26 = int_to_ptr.vmem [resolvable:$true] %s25
      %31 = dma.hbm_to_vmem [thread:$0]  %s2, 18432, %s26, [#allocation3], 512, 512, 32
    $region13: #{tpu_custom_call.1} parent=1 // pred_fallthru
      _
    // Predicated region
    $region14: #{tpu_custom_call.1} parent=1 // pred_check
      _
    $region15: #{tpu_custom_call.1} parent=1 // pred_check_branch
      %33 = sbr.rel (0) target = $region17
    $region16: #{tpu_custom_call.1} parent=1 // pred_region
      _
    $region17: #{tpu_custom_call.1} parent=1 // pred_fallthru
      _
    // Predicated region
    $region18: #{tpu_custom_call.1} parent=1 // pred_check
      _
    $region19: #{tpu_custom_call.1} parent=1 // pred_check_branch
      %35 = sbr.rel (0) target = $region21
    $region20: #{tpu_custom_call.1} parent=1 // pred_region
      _
    $region21: #{tpu_custom_call.1} parent=1 // pred_fallthru
      _
    // Predicated region
    $region22: #{tpu_custom_call.1} parent=1 // pred_check
      _
    $region23: #{tpu_custom_call.1} parent=1 // pred_check_branch
      %37 = sbr.rel (0) target = $region25
    $region24: #{tpu_custom_call.1} parent=1 // pred_region
      _
    $region25: #{tpu_custom_call.1} parent=1 // pred_fallthru
      _
    // Predicated region
    $region26: #{tpu_custom_call.1} parent=1 // pred_check
      _
    $region27: #{tpu_custom_call.1} parent=1 // pred_check_branch
      %39 = sbr.rel (0) target = $region29
    $region28: #{tpu_custom_call.1} parent=1 // pred_region
      _
    $region29: #{tpu_custom_call.1} parent=1 // pred_fallthru
      _
    // Predicated region
    $region30: #{tpu_custom_call.1} parent=1 // pred_check
      _
    $region31: #{tpu_custom_call.1} parent=1 // pred_check_branch
      %41 = sbr.rel (0) target = $region33
    $region32: #{tpu_custom_call.1} parent=1 // pred_region
      _
    $region33: #{tpu_custom_call.1} parent=1 // pred_fallthru
      _
    // Predicated region
    $region34: #{tpu_custom_call.1} parent=1 // pred_check
      _
    $region35: #{tpu_custom_call.1} parent=1 // pred_check_branch
      %43 = sbr.rel (0) target = $region37
    $region36: #{tpu_custom_call.1} parent=1 // pred_region
      _
    $region37: #{tpu_custom_call.1} parent=1 // pred_fallthru
      _
    // Predicated region
    $region38: #{tpu_custom_call.1} parent=1 // pred_check
      _
    $region39: #{tpu_custom_call.1} parent=1 // pred_check_branch
      %45 = sbr.rel (0) target = $region41
    $region40: #{tpu_custom_call.1} parent=1 // pred_region
      %46 = dma.done [#allocation3], 18432
    $region41: #{tpu_custom_call.1} parent=1 // pred_fallthru
      _
    %v47 = vld [vmem:[%s0] sm:$0xff]
    %v48 = vld [vmem:[%s0 + $0x8] sm:$0xff]
    %v49 = vld [vmem:[%s0 + $0x10] sm:$0xff]
    %v50 = vld [vmem:[%s0 + $0x18] sm:$0xff]
    %v51 = vld [vmem:[%s3] sm:$0xff]
    %v52 = vld [vmem:[%s3 + $0x8] sm:$0xff]
    %v53 = vld [vmem:[%s3 + $0x10] sm:$0xff]
    %v54 = vld [vmem:[%s3 + $0x18] sm:$0xff]
    %s55 = scalar_lea.vmem %s3, 32
    %v56 = vld [vmem:[%s55] sm:$0xff]
    %v57 = vld [vmem:[%s55 + $0x8] sm:$0xff]
    %v58 = vld [vmem:[%s55 + $0x10] sm:$0xff]
    %v59 = vld [vmem:[%s55 + $0x18] sm:$0xff]
    %s60 = scalar_lea.vmem %s3, 64
    %v61 = vld [vmem:[%s60] sm:$0xff]
    %v62 = vld [vmem:[%s60 + $0x8] sm:$0xff]
    %v63 = vld [vmem:[%s60 + $0x10] sm:$0xff]
    %v64 = vld [vmem:[%s60 + $0x18] sm:$0xff]
    %v65 = vld [vmem:[%s1] sm:$0xff]
    %v66 = vld [vmem:[%s1 + $0x8] sm:$0xff]
    %v67 = vld [vmem:[%s1 + $0x10] sm:$0xff]
    %v68 = vld [vmem:[%s1 + $0x18] sm:$0xff]
    %70 = vset.pattern.permute.xlu0 0
    %71 = vperm.xlu0 %70, %v51
    %v72 = vpop.permute.xlu0 %71
    %75 = vset.pattern.permute.xlu0 0
    %76 = vperm.xlu0 %75, %v52
    %v77 = vpop.permute.xlu0 %76
    %80 = vset.pattern.permute.xlu0 0
    %81 = vperm.xlu0 %80, %v53
    %v82 = vpop.permute.xlu0 %81
    %85 = vset.pattern.permute.xlu0 0
    %86 = vperm.xlu0 %85, %v54
    %v87 = vpop.permute.xlu0 %86
    %vm89 = vcmask 64512
    %v91 = vsel %vm89, %v65, 0
    %v94 = vsel %vm89, %v66, 0
    %v97 = vsel %vm89, %v67, 0
    %v100 = vsel %vm89, %v68, 0
    %102 = vmatprep.subr.mxu0 %v48
    %103 = vmatpush1.msra.mxu0 %v47
    %104 = vmatprep.subr.mxu0 0.0
    %105 = vmatpush1.msra.mxu0 0.0
    %106 = vmatprep.subr.mxu0 0.0
    %107 = vmatpush1.msra.mxu0 0.0
    %108 = vmatprep.subr.mxu0 0.0
    %109 = vmatpush1.msra.mxu0 0.0
    %110 = vmatprep.subr.mxu0 0.0
    %111 = vmatpush1.msra.mxu0 0.0
    %112 = vmatprep.subr.mxu0 0.0
    %113 = vmatpush1.msra.mxu0 0.0
    %114 = vmatprep.subr.mxu0 0.0
    %115 = vmatpush1.msra.mxu0 0.0
    %116 = vmatprep.subr.mxu0 0.0
    %117 = vmatpush1.msra.mxu0 0.0
    %118 = vmatprep.subr.mxu0 0.0
    %119 = vmatpush1.msra.mxu0 0.0
    %120 = vmatprep.subr.mxu0 0.0
    %121 = vmatpush1.msra.mxu0 0.0
    %122 = vmatprep.subr.mxu0 0.0
    %123 = vmatpush1.msra.mxu0 0.0
    %124 = vmatprep.subr.mxu0 0.0
    %125 = vmatpush1.msra.mxu0 0.0
    %126 = vmatprep.subr.mxu0 0.0
    %127 = vmatpush1.msra.mxu0 0.0
    %128 = vmatprep.subr.mxu0 0.0
    %129 = vmatpush1.msra.mxu0 0.0
    %130 = vmatprep.subr.mxu0 0.0
    %131 = vmatpush1.msra.mxu0 0.0
    %132 = vmatprep.subr.mxu0 0.0
    %133 = vmatpush1.msra.mxu0 0.0
    %134 = vmatprep.subr.mxu0 0.0
    %135 = vmatpush1.msra.mxu0 0.0
    %136 = vmatprep.subr.mxu0 0.0
    %137 = vmatpush1.msra.mxu0 0.0
    %138 = vmatprep.subr.mxu0 0.0
    %139 = vmatpush1.msra.mxu0 0.0
    %140 = vmatprep.subr.mxu0 0.0
    %141 = vmatpush1.msra.mxu0 0.0
    %142 = vmatprep.subr.mxu0 0.0
    %143 = vmatpush1.msra.mxu0 0.0
    %144 = vmatprep.subr.mxu0 0.0
    %145 = vmatpush1.msra.mxu0 0.0
    %146 = vmatprep.subr.mxu0 0.0
    %147 = vmatpush1.msra.mxu0 0.0
    %148 = vmatprep.subr.mxu0 0.0
    %149 = vmatpush1.msra.mxu0 0.0
    %150 = vmatprep.subr.mxu0 0.0
    %151 = vmatpush1.msra.mxu0 0.0
    %152 = vmatprep.subr.mxu0 0.0
    %153 = vmatpush1.msra.mxu0 0.0
    %154 = vmatprep.subr.mxu0 0.0
    %155 = vmatpush1.msra.mxu0 0.0
    %156 = vmatprep.subr.mxu0 0.0
    %157 = vmatpush1.msra.mxu0 0.0
    %158 = vmatprep.subr.mxu0 0.0
    %159 = vmatpush1.msra.mxu0 0.0
    %160 = vmatprep.subr.mxu0 0.0
    %161 = vmatpush1.msra.mxu0 0.0
    %162 = vmatprep.subr.mxu0 0.0
    %163 = vmatpush1.msra.mxu0 0.0
    %164 = vmatprep.subr.mxu0 0.0
    %165 = vmatpush1.msra.mxu0 0.0
    %166 = vmatprep.mubr.f32.mxu0 0.0
    %167 = vmatmul.mubr.f32.gmra.mrb[0].mxu0 %v91
    %v168 = vpop.f32.mrb[0].mxu0
    %v169 = vadd.f32 %v72, %v168
    %v170 = vpop.f32.mrb[0].mxu0
    %v171 = vadd.f32 %v72, %v170
    %172 = vmatprep.mubr.f32.mxu0 0.0
    %173 = vmatmul.mubr.f32.gmra.mrb[0].mxu0 %v94
    %v174 = vpop.f32.mrb[0].mxu0
    %v175 = vadd.f32 %v77, %v174
    %v176 = vpop.f32.mrb[0].mxu0
    %v177 = vadd.f32 %v77, %v176
    %178 = vmatprep.mubr.f32.mxu0 0.0
    %179 = vmatmul.mubr.f32.gmra.mrb[0].mxu0 %v97
    %v180 = vpop.f32.mrb[0].mxu0
    %v181 = vadd.f32 %v82, %v180
    %v182 = vpop.f32.mrb[0].mxu0
    %v183 = vadd.f32 %v82, %v182
    %184 = vmatprep.mubr.f32.mxu0 0.0
    %185 = vmatmul.mubr.f32.gmra.mrb[0].mxu0 %v100
    %v186 = vpop.f32.mrb[0].mxu0
    %v187 = vadd.f32 %v87, %v186
    %v188 = vpop.f32.mrb[0].mxu0
    %v189 = vadd.f32 %v87, %v188
    %190 = vdwg.mxu0
    %191 = vmatprep.subr.mxu0 %v50
    %192 = vmatpush1.msra.mxu0 %v49
    %193 = vmatprep.subr.mxu0 0.0
    %194 = vmatpush1.msra.mxu0 0.0
    %195 = vmatprep.subr.mxu0 0.0
    %196 = vmatpush1.msra.mxu0 0.0
    %197 = vmatprep.subr.mxu0 0.0
    %198 = vmatpush1.msra.mxu0 0.0
    %199 = vmatprep.subr.mxu0 0.0
    %200 = vmatpush1.msra.mxu0 0.0
    %201 = vmatprep.subr.mxu0 0.0
    %202 = vmatpush1.msra.mxu0 0.0
    %203 = vmatprep.subr.mxu0 0.0
    %204 = vmatpush1.msra.mxu0 0.0
    %205 = vmatprep.subr.mxu0 0.0
    %206 = vmatpush1.msra.mxu0 0.0
    %207 = vmatprep.subr.mxu0 0.0
    %208 = vmatpush1.msra.mxu0 0.0
    %209 = vmatprep.subr.mxu0 0.0
    %210 = vmatpush1.msra.mxu0 0.0
    %211 = vmatprep.subr.mxu0 0.0
    %212 = vmatpush1.msra.mxu0 0.0
    %213 = vmatprep.subr.mxu0 0.0
    %214 = vmatpush1.msra.mxu0 0.0
    %215 = vmatprep.subr.mxu0 0.0
    %216 = vmatpush1.msra.mxu0 0.0
    %217 = vmatprep.subr.mxu0 0.0
    %218 = vmatpush1.msra.mxu0 0.0
    %219 = vmatprep.subr.mxu0 0.0
    %220 = vmatpush1.msra.mxu0 0.0
    %221 = vmatprep.subr.mxu0 0.0
    %222 = vmatpush1.msra.mxu0 0.0
    %223 = vmatprep.subr.mxu0 0.0
    %224 = vmatpush1.msra.mxu0 0.0
    %225 = vmatprep.subr.mxu0 0.0
    %226 = vmatpush1.msra.mxu0 0.0
    %227 = vmatprep.subr.mxu0 0.0
    %228 = vmatpush1.msra.mxu0 0.0
    %229 = vmatprep.subr.mxu0 0.0
    %230 = vmatpush1.msra.mxu0 0.0
    %231 = vmatprep.subr.mxu0 0.0
    %232 = vmatpush1.msra.mxu0 0.0
    %233 = vmatprep.subr.mxu0 0.0
    %234 = vmatpush1.msra.mxu0 0.0
    %235 = vmatprep.subr.mxu0 0.0
    %236 = vmatpush1.msra.mxu0 0.0
    %237 = vmatprep.subr.mxu0 0.0
    %238 = vmatpush1.msra.mxu0 0.0
    %239 = vmatprep.subr.mxu0 0.0
    %240 = vmatpush1.msra.mxu0 0.0
    %241 = vmatprep.subr.mxu0 0.0
    %242 = vmatpush1.msra.mxu0 0.0
    %243 = vmatprep.subr.mxu0 0.0
    %244 = vmatpush1.msra.mxu0 0.0
    %245 = vmatprep.subr.mxu0 0.0
    %246 = vmatpush1.msra.mxu0 0.0
    %247 = vmatprep.subr.mxu0 0.0
    %248 = vmatpush1.msra.mxu0 0.0
    %249 = vmatprep.subr.mxu0 0.0
    %250 = vmatpush1.msra.mxu0 0.0
    %251 = vmatprep.subr.mxu0 0.0
    %252 = vmatpush1.msra.mxu0 0.0
    %253 = vmatprep.subr.mxu0 0.0
    %254 = vmatpush1.msra.mxu0 0.0
    %255 = vmatprep.mubr.f32.mxu0 0.0
    %256 = vmatmul.mubr.f32.gmra.mrb[0].mxu0 %v91
    %v257 = vpop.f32.mrb[0].mxu0
    %v258 = vadd.f32 %v72, %v257
    %v259 = vpop.f32.mrb[0].mxu0
    %v260 = vadd.f32 %v72, %v259
    %261 = vmatprep.mubr.f32.mxu0 0.0
    %262 = vmatmul.mubr.f32.gmra.mrb[0].mxu0 %v94
    %v263 = vpop.f32.mrb[0].mxu0
    %v264 = vadd.f32 %v77, %v263
    %v265 = vpop.f32.mrb[0].mxu0
    %v266 = vadd.f32 %v77, %v265
    %267 = vmatprep.mubr.f32.mxu0 0.0
    %268 = vmatmul.mubr.f32.gmra.mrb[0].mxu0 %v97
    %v269 = vpop.f32.mrb[0].mxu0
    %v270 = vadd.f32 %v82, %v269
    %v271 = vpop.f32.mrb[0].mxu0
    %v272 = vadd.f32 %v82, %v271
    %273 = vmatprep.mubr.f32.mxu0 0.0
    %274 = vmatmul.mubr.f32.gmra.mrb[0].mxu0 %v100
    %v275 = vpop.f32.mrb[0].mxu0
    %v276 = vadd.f32 %v87, %v275
    %v277 = vpop.f32.mrb[0].mxu0
    %v278 = vadd.f32 %v87, %v277
    %279 = vdwg.mxu0
    %v280 = vadd.f32 %v169, 3.0
    %v281 = vadd.f32 %v171, 3.0
    %v282 = vadd.f32 %v258, 3.0
    %v283 = vadd.f32 %v260, 3.0
    %v284 = vadd.f32 %v175, 3.0
    %v285 = vadd.f32 %v177, 3.0
    %v286 = vadd.f32 %v264, 3.0
    %v287 = vadd.f32 %v266, 3.0
    %v288 = vadd.f32 %v181, 3.0
    %v289 = vadd.f32 %v183, 3.0
    %v290 = vadd.f32 %v270, 3.0
    %v291 = vadd.f32 %v272, 3.0
    %v292 = vadd.f32 %v187, 3.0
    %v293 = vadd.f32 %v189, 3.0
    %v294 = vadd.f32 %v276, 3.0
    %v295 = vadd.f32 %v278, 3.0
    %v296 = vmax.f32 %v280, 0.0
    %v297 = vmax.f32 %v281, 0.0
    %v298 = vmax.f32 %v282, 0.0
    %v299 = vmax.f32 %v283, 0.0
    %v300 = vmax.f32 %v284, 0.0
    %v301 = vmax.f32 %v285, 0.0
    %v302 = vmax.f32 %v286, 0.0
    %v303 = vmax.f32 %v287, 0.0
    %v304 = vmax.f32 %v288, 0.0
    %v305 = vmax.f32 %v289, 0.0
    %v306 = vmax.f32 %v290, 0.0
    %v307 = vmax.f32 %v291, 0.0
    %v308 = vmax.f32 %v292, 0.0
    %v309 = vmax.f32 %v293, 0.0
    %v310 = vmax.f32 %v294, 0.0
    %v311 = vmax.f32 %v295, 0.0
    %v312 = vmin.f32 %v296, 6.0
    %v313 = vmin.f32 %v297, 6.0
    %v314 = vmin.f32 %v298, 6.0
    %v315 = vmin.f32 %v299, 6.0
    %v316 = vmin.f32 %v300, 6.0
    %v317 = vmin.f32 %v301, 6.0
    %v318 = vmin.f32 %v302, 6.0
    %v319 = vmin.f32 %v303, 6.0
    %v320 = vmin.f32 %v304, 6.0
    %v321 = vmin.f32 %v305, 6.0
    %v322 = vmin.f32 %v306, 6.0
    %v323 = vmin.f32 %v307, 6.0
    %v324 = vmin.f32 %v308, 6.0
    %v325 = vmin.f32 %v309, 6.0
    %v326 = vmin.f32 %v310, 6.0
    %v327 = vmin.f32 %v311, 6.0
    %v328 = vmul.f32 %v312, 0.16666667
    %v329 = vmul.f32 %v313, 0.16666667
    %v330 = vmul.f32 %v314, 0.16666667
    %v331 = vmul.f32 %v315, 0.16666667
    %v332 = vmul.f32 %v316, 0.16666667
    %v333 = vmul.f32 %v317, 0.16666667
    %v334 = vmul.f32 %v318, 0.16666667
    %v335 = vmul.f32 %v319, 0.16666667
    %v336 = vmul.f32 %v320, 0.16666667
    %v337 = vmul.f32 %v321, 0.16666667
    %v338 = vmul.f32 %v322, 0.16666667
    %v339 = vmul.f32 %v323, 0.16666667
    %v340 = vmul.f32 %v324, 0.16666667
    %v341 = vmul.f32 %v325, 0.16666667
    %v342 = vmul.f32 %v326, 0.16666667
    %v343 = vmul.f32 %v327, 0.16666667
    %v344 = vmul.f32 %v169, %v328
    %v345 = vmul.f32 %v171, %v329
    %v346 = vmul.f32 %v258, %v330
    %v347 = vmul.f32 %v260, %v331
    %v348 = vmul.f32 %v175, %v332
    %v349 = vmul.f32 %v177, %v333
    %v350 = vmul.f32 %v264, %v334
    %v351 = vmul.f32 %v266, %v335
    %v352 = vmul.f32 %v181, %v336
    %v353 = vmul.f32 %v183, %v337
    %v354 = vmul.f32 %v270, %v338
    %v355 = vmul.f32 %v272, %v339
    %v356 = vmul.f32 %v187, %v340
    %v357 = vmul.f32 %v189, %v341
    %v358 = vmul.f32 %v276, %v342
    %v359 = vmul.f32 %v278, %v343
    %360 = vrot.lane.b32.xlu0 %v344, 17
    %v361 = vpop.permute.xlu0 %360
    %362 = vrot.lane.b32.xlu0 %v348, 17
    %v363 = vpop.permute.xlu0 %362
    %364 = vrot.lane.b32.xlu0 %v352, 17
    %v365 = vpop.permute.xlu0 %364
    %366 = vrot.lane.b32.xlu0 %v356, 17
    %v367 = vpop.permute.xlu0 %366
    %368 = vrot.lane.b32.xlu0 %v345, 17
    %v369 = vpop.permute.xlu0 %368
    %370 = vrot.lane.b32.xlu0 %v349, 17
    %v371 = vpop.permute.xlu0 %370
    %372 = vrot.lane.b32.xlu0 %v353, 17
    %v373 = vpop.permute.xlu0 %372
    %374 = vrot.lane.b32.xlu0 %v357, 17
    %v375 = vpop.permute.xlu0 %374
    %376 = vrot.lane.b32.xlu0 %v346, 17
    %v377 = vpop.permute.xlu0 %376
    %378 = vrot.lane.b32.xlu0 %v350, 17
    %v379 = vpop.permute.xlu0 %378
    %380 = vrot.lane.b32.xlu0 %v354, 17
    %v381 = vpop.permute.xlu0 %380
    %382 = vrot.lane.b32.xlu0 %v358, 17
    %v383 = vpop.permute.xlu0 %382
    %384 = vrot.lane.b32.xlu0 %v347, 17
    %v385 = vpop.permute.xlu0 %384
    %386 = vrot.lane.b32.xlu0 %v351, 17
    %v387 = vpop.permute.xlu0 %386
    %388 = vrot.lane.b32.xlu0 %v355, 17
    %v389 = vpop.permute.xlu0 %388
    %390 = vrot.lane.b32.xlu0 %v359, 17
    %v391 = vpop.permute.xlu0 %390
    %v392 = vlaneseq
    %v393 = vand.u32 %v392, 127
    %vm394 = vcmp.lt.s32.totalorder %v393, 17
    %v395 = vsel %vm394, %v377, %v385
    %v396 = vsel %vm394, %v379, %v387
    %v397 = vsel %vm394, %v381, %v389
    %v398 = vsel %vm394, %v383, %v391
    %v399 = vsel %vm394, %v369, %v377
    %v400 = vsel %vm394, %v371, %v379
    %v401 = vsel %vm394, %v373, %v381
    %v402 = vsel %vm394, %v375, %v383
    %v403 = vsel %vm394, %v361, %v369
    %v404 = vsel %vm394, %v363, %v371
    %v405 = vsel %vm394, %v365, %v373
    %v406 = vsel %vm394, %v367, %v375
    %v407 = vsel %vm394, %v385, %v361
    %v408 = vsel %vm394, %v387, %v363
    %v409 = vsel %vm394, %v389, %v365
    %v410 = vsel %vm394, %v391, %v367
    %v411 = vld [vmem:[#allocation2] sm:$0xff]
    %v412 = vld [vmem:[#allocation2 + $0x8] sm:$0xff]
    %v413 = vld [vmem:[#allocation2 + $0x10] sm:$0xff]
    %v414 = vld [vmem:[#allocation2 + $0x18] sm:$0xff]
    %v415 = vld [vmem:[#allocation2 + $0x20] sm:$0xff]
    %v416 = vld [vmem:[#allocation2 + $0x28] sm:$0xff]
    %v417 = vld [vmem:[#allocation2 + $0x30] sm:$0xff]
    %v418 = vld [vmem:[#allocation2 + $0x38] sm:$0xff]
    %v419 = vld [vmem:[#allocation2 + $0x40] sm:$0xff]
    %v420 = vld [vmem:[#allocation2 + $0x48] sm:$0xff]
    %v421 = vld [vmem:[#allocation2 + $0x50] sm:$0xff]
    %v422 = vld [vmem:[#allocation2 + $0x58] sm:$0xff]
    %v423 = vld [vmem:[#allocation2 + $0x60] sm:$0xff]
    %v424 = vld [vmem:[#allocation2 + $0x68] sm:$0xff]
    %v425 = vld [vmem:[#allocation2 + $0x70] sm:$0xff]
    %v426 = vld [vmem:[#allocation2 + $0x78] sm:$0xff]
    %v427 = vmul.f32 %v407, %v411
    %v428 = vmul.f32 %v403, %v412
    %v429 = vmul.f32 %v399, %v413
    %v430 = vmul.f32 %v395, %v414
    %v431 = vmul.f32 %v408, %v415
    %v432 = vmul.f32 %v404, %v416
    %v433 = vmul.f32 %v400, %v417
    %v434 = vmul.f32 %v396, %v418
    %v435 = vmul.f32 %v409, %v419
    %v436 = vmul.f32 %v405, %v420
    %v437 = vmul.f32 %v401, %v421
    %v438 = vmul.f32 %v397, %v422
    %v439 = vmul.f32 %v410, %v423
    %v440 = vmul.f32 %v406, %v424
    %v441 = vmul.f32 %v402, %v425
    %v442 = vmul.f32 %v398, %v426
    %443 = vrot.lane.b32.xlu0 %v344, 16
    %v444 = vpop.permute.xlu0 %443
    %445 = vrot.lane.b32.xlu0 %v348, 16
    %v446 = vpop.permute.xlu0 %445
    %447 = vrot.lane.b32.xlu0 %v352, 16
    %v448 = vpop.permute.xlu0 %447
    %449 = vrot.lane.b32.xlu0 %v356, 16
    %v450 = vpop.permute.xlu0 %449
    %451 = vrot.lane.b32.xlu0 %v345, 16
    %v452 = vpop.permute.xlu0 %451
    %453 = vrot.lane.b32.xlu0 %v349, 16
    %v454 = vpop.permute.xlu0 %453
    %455 = vrot.lane.b32.xlu0 %v353, 16
    %v456 = vpop.permute.xlu0 %455
    %457 = vrot.lane.b32.xlu0 %v357, 16
    %v458 = vpop.permute.xlu0 %457
    %459 = vrot.lane.b32.xlu0 %v346, 16
    %v460 = vpop.permute.xlu0 %459
    %461 = vrot.lane.b32.xlu0 %v350, 16
    %v462 = vpop.permute.xlu0 %461
    %463 = vrot.lane.b32.xlu0 %v354, 16
    %v464 = vpop.permute.xlu0 %463
    %465 = vrot.lane.b32.xlu0 %v358, 16
    %v466 = vpop.permute.xlu0 %465
    %467 = vrot.lane.b32.xlu0 %v347, 16
    %v468 = vpop.permute.xlu0 %467
    %469 = vrot.lane.b32.xlu0 %v351, 16
    %v470 = vpop.permute.xlu0 %469
    %471 = vrot.lane.b32.xlu0 %v355, 16
    %v472 = vpop.permute.xlu0 %471
    %473 = vrot.lane.b32.xlu0 %v359, 16
    %v474 = vpop.permute.xlu0 %473
    %vm475 = vcmp.lt.s32.totalorder %v393, 16
    %v476 = vsel %vm475, %v460, %v468
    %v477 = vsel %vm475, %v462, %v470
    %v478 = vsel %vm475, %v464, %v472
    %v479 = vsel %vm475, %v466, %v474
    %v480 = vsel %vm475, %v452, %v460
    %v481 = vsel %vm475, %v454, %v462
    %v482 = vsel %vm475, %v456, %v464
    %v483 = vsel %vm475, %v458, %v466
    %v484 = vsel %vm475, %v444, %v452
    %v485 = vsel %vm475, %v446, %v454
    %v486 = vsel %vm475, %v448, %v456
    %v487 = vsel %vm475, %v450, %v458
    %v488 = vsel %vm475, %v468, %v444
    %v489 = vsel %vm475, %v470, %v446
    %v490 = vsel %vm475, %v472, %v448
    %v491 = vsel %vm475, %v474, %v450
    %s492 = scalar_lea.vmem [#allocation2], 128
    %v493 = vld [vmem:[%s492] sm:$0xff]
    %v494 = vld [vmem:[%s492 + $0x8] sm:$0xff]
    %v495 = vld [vmem:[%s492 + $0x10] sm:$0xff]
    %v496 = vld [vmem:[%s492 + $0x18] sm:$0xff]
    %v497 = vld [vmem:[%s492 + $0x20] sm:$0xff]
    %v498 = vld [vmem:[%s492 + $0x28] sm:$0xff]
    %v499 = vld [vmem:[%s492 + $0x30] sm:$0xff]
    %v500 = vld [vmem:[%s492 + $0x38] sm:$0xff]
    %v501 = vld [vmem:[%s492 + $0x40] sm:$0xff]
    %v502 = vld [vmem:[%s492 + $0x48] sm:$0xff]
    %v503 = vld [vmem:[%s492 + $0x50] sm:$0xff]
    %v504 = vld [vmem:[%s492 + $0x58] sm:$0xff]
    %v505 = vld [vmem:[%s492 + $0x60] sm:$0xff]
    %v506 = vld [vmem:[%s492 + $0x68] sm:$0xff]
    %v507 = vld [vmem:[%s492 + $0x70] sm:$0xff]
    %v508 = vld [vmem:[%s492 + $0x78] sm:$0xff]
    %v509 = vmul.f32 %v488, %v493
    %v510 = vmul.f32 %v484, %v494
    %v511 = vmul.f32 %v480, %v495
    %v512 = vmul.f32 %v476, %v496
    %v513 = vmul.f32 %v489, %v497
    %v514 = vmul.f32 %v485, %v498
    %v515 = vmul.f32 %v481, %v499
    %v516 = vmul.f32 %v477, %v500
    %v517 = vmul.f32 %v490, %v501
    %v518 = vmul.f32 %v486, %v502
    %v519 = vmul.f32 %v482, %v503
    %v520 = vmul.f32 %v478, %v504
    %v521 = vmul.f32 %v491, %v505
    %v522 = vmul.f32 %v487, %v506
    %v523 = vmul.f32 %v483, %v507
    %v524 = vmul.f32 %v479, %v508
    %v525 = vadd.f32 %v427, %v509
    %v526 = vadd.f32 %v428, %v510
    %v527 = vadd.f32 %v429, %v511
    %v528 = vadd.f32 %v430, %v512
    %v529 = vadd.f32 %v431, %v513
    %v530 = vadd.f32 %v432, %v514
    %v531 = vadd.f32 %v433, %v515
    %v532 = vadd.f32 %v434, %v516
    %v533 = vadd.f32 %v435, %v517
    %v534 = vadd.f32 %v436, %v518
    %v535 = vadd.f32 %v437, %v519
    %v536 = vadd.f32 %v438, %v520
    %v537 = vadd.f32 %v439, %v521
    %v538 = vadd.f32 %v440, %v522
    %v539 = vadd.f32 %v441, %v523
    %v540 = vadd.f32 %v442, %v524
    %541 = vrot.lane.b32.xlu0 %v344, 15
    %v542 = vpop.permute.xlu0 %541
    %543 = vrot.lane.b32.xlu0 %v348, 15
    %v544 = vpop.permute.xlu0 %543
    %545 = vrot.lane.b32.xlu0 %v352, 15
    %v546 = vpop.permute.xlu0 %545
    %547 = vrot.lane.b32.xlu0 %v356, 15
    %v548 = vpop.permute.xlu0 %547
    %549 = vrot.lane.b32.xlu0 %v345, 15
    %v550 = vpop.permute.xlu0 %549
    %551 = vrot.lane.b32.xlu0 %v349, 15
    %v552 = vpop.permute.xlu0 %551
    %553 = vrot.lane.b32.xlu0 %v353, 15
    %v554 = vpop.permute.xlu0 %553
    %555 = vrot.lane.b32.xlu0 %v357, 15
    %v556 = vpop.permute.xlu0 %555
    %557 = vrot.lane.b32.xlu0 %v346, 15
    %v558 = vpop.permute.xlu0 %557
    %559 = vrot.lane.b32.xlu0 %v350, 15
    %v560 = vpop.permute.xlu0 %559
    %561 = vrot.lane.b32.xlu0 %v354, 15
    %v562 = vpop.permute.xlu0 %561
    %563 = vrot.lane.b32.xlu0 %v358, 15
    %v564 = vpop.permute.xlu0 %563
    %565 = vrot.lane.b32.xlu0 %v347, 15
    %v566 = vpop.permute.xlu0 %565
    %567 = vrot.lane.b32.xlu0 %v351, 15
    %v568 = vpop.permute.xlu0 %567
    %569 = vrot.lane.b32.xlu0 %v355, 15
    %v570 = vpop.permute.xlu0 %569
    %571 = vrot.lane.b32.xlu0 %v359, 15
    %v572 = vpop.permute.xlu0 %571
    %vm573 = vcmp.lt.s32.totalorder %v393, 15
    %v574 = vsel %vm573, %v558, %v566
    %v575 = vsel %vm573, %v560, %v568
    %v576 = vsel %vm573, %v562, %v570
    %v577 = vsel %vm573, %v564, %v572
    %v578 = vsel %vm573, %v550, %v558
    %v579 = vsel %vm573, %v552, %v560
    %v580 = vsel %vm573, %v554, %v562
    %v581 = vsel %vm573, %v556, %v564
    %v582 = vsel %vm573, %v542, %v550
    %v583 = vsel %vm573, %v544, %v552
    %v584 = vsel %vm573, %v546, %v554
    %v585 = vsel %vm573, %v548, %v556
    %v586 = vsel %vm573, %v566, %v542
    %v587 = vsel %vm573, %v568, %v544
    %v588 = vsel %vm573, %v570, %v546
    %v589 = vsel %vm573, %v572, %v548
    %s590 = scalar_lea.vmem [#allocation2], 256
    %v591 = vld [vmem:[%s590] sm:$0xff]
    %v592 = vld [vmem:[%s590 + $0x8] sm:$0xff]
    %v593 = vld [vmem:[%s590 + $0x10] sm:$0xff]
    %v594 = vld [vmem:[%s590 + $0x18] sm:$0xff]
    %v595 = vld [vmem:[%s590 + $0x20] sm:$0xff]
    %v596 = vld [vmem:[%s590 + $0x28] sm:$0xff]
    %v597 = vld [vmem:[%s590 + $0x30] sm:$0xff]
    %v598 = vld [vmem:[%s590 + $0x38] sm:$0xff]
    %v599 = vld [vmem:[%s590 + $0x40] sm:$0xff]
    %v600 = vld [vmem:[%s590 + $0x48] sm:$0xff]
    %v601 = vld [vmem:[%s590 + $0x50] sm:$0xff]
    %v602 = vld [vmem:[%s590 + $0x58] sm:$0xff]
    %v603 = vld [vmem:[%s590 + $0x60] sm:$0xff]
    %v604 = vld [vmem:[%s590 + $0x68] sm:$0xff]
    %v605 = vld [vmem:[%s590 + $0x70] sm:$0xff]
    %v606 = vld [vmem:[%s590 + $0x78] sm:$0xff]
    %v607 = vmul.f32 %v586, %v591
    %v608 = vmul.f32 %v582, %v592
    %v609 = vmul.f32 %v578, %v593
    %v610 = vmul.f32 %v574, %v594
    %v611 = vmul.f32 %v587, %v595
    %v612 = vmul.f32 %v583, %v596
    %v613 = vmul.f32 %v579, %v597
    %v614 = vmul.f32 %v575, %v598
    %v615 = vmul.f32 %v588, %v599
    %v616 = vmul.f32 %v584, %v600
    %v617 = vmul.f32 %v580, %v601
    %v618 = vmul.f32 %v576, %v602
    %v619 = vmul.f32 %v589, %v603
    %v620 = vmul.f32 %v585, %v604
    %v621 = vmul.f32 %v581, %v605
    %v622 = vmul.f32 %v577, %v606
    %v623 = vadd.f32 %v525, %v607
    %v624 = vadd.f32 %v526, %v608
    %v625 = vadd.f32 %v527, %v609
    %v626 = vadd.f32 %v528, %v610
    %v627 = vadd.f32 %v529, %v611
    %v628 = vadd.f32 %v530, %v612
    %v629 = vadd.f32 %v531, %v613
    %v630 = vadd.f32 %v532, %v614
    %v631 = vadd.f32 %v533, %v615
    %v632 = vadd.f32 %v534, %v616
    %v633 = vadd.f32 %v535, %v617
    %v634 = vadd.f32 %v536, %v618
    %v635 = vadd.f32 %v537, %v619
    %v636 = vadd.f32 %v538, %v620
    %v637 = vadd.f32 %v539, %v621
    %v638 = vadd.f32 %v540, %v622
    %639 = vrot.lane.b32.xlu0 %v344, 1
    %v640 = vpop.permute.xlu0 %639
    %641 = vrot.lane.b32.xlu0 %v348, 1
    %v642 = vpop.permute.xlu0 %641
    %643 = vrot.lane.b32.xlu0 %v352, 1
    %v644 = vpop.permute.xlu0 %643
    %645 = vrot.lane.b32.xlu0 %v356, 1
    %v646 = vpop.permute.xlu0 %645
    %647 = vrot.lane.b32.xlu0 %v345, 1
    %v648 = vpop.permute.xlu0 %647
    %649 = vrot.lane.b32.xlu0 %v349, 1
    %v650 = vpop.permute.xlu0 %649
    %651 = vrot.lane.b32.xlu0 %v353, 1
    %v652 = vpop.permute.xlu0 %651
    %653 = vrot.lane.b32.xlu0 %v357, 1
    %v654 = vpop.permute.xlu0 %653
    %655 = vrot.lane.b32.xlu0 %v346, 1
    %v656 = vpop.permute.xlu0 %655
    %657 = vrot.lane.b32.xlu0 %v350, 1
    %v658 = vpop.permute.xlu0 %657
    %659 = vrot.lane.b32.xlu0 %v354, 1
    %v660 = vpop.permute.xlu0 %659
    %661 = vrot.lane.b32.xlu0 %v358, 1
    %v662 = vpop.permute.xlu0 %661
    %663 = vrot.lane.b32.xlu0 %v347, 1
    %v664 = vpop.permute.xlu0 %663
    %665 = vrot.lane.b32.xlu0 %v351, 1
    %v666 = vpop.permute.xlu0 %665
    %667 = vrot.lane.b32.xlu0 %v355, 1
    %v668 = vpop.permute.xlu0 %667
    %669 = vrot.lane.b32.xlu0 %v359, 1
    %v670 = vpop.permute.xlu0 %669
    %vm671 = vcmp.lt.s32.totalorder %v393, 1
    %v672 = vsel %vm671, %v656, %v664
    %v673 = vsel %vm671, %v658, %v666
    %v674 = vsel %vm671, %v660, %v668
    %v675 = vsel %vm671, %v662, %v670
    %v676 = vsel %vm671, %v648, %v656
    %v677 = vsel %vm671, %v650, %v658
    %v678 = vsel %vm671, %v652, %v660
    %v679 = vsel %vm671, %v654, %v662
    %v680 = vsel %vm671, %v640, %v648
    %v681 = vsel %vm671, %v642, %v650
    %v682 = vsel %vm671, %v644, %v652
    %v683 = vsel %vm671, %v646, %v654
    %v684 = vsel %vm671, %v664, %v640
    %v685 = vsel %vm671, %v666, %v642
    %v686 = vsel %vm671, %v668, %v644
    %v687 = vsel %vm671, %v670, %v646
    %s688 = scalar_lea.vmem [#allocation2], 384
    %v689 = vld [vmem:[%s688] sm:$0xff]
    %v690 = vld [vmem:[%s688 + $0x8] sm:$0xff]
    %v691 = vld [vmem:[%s688 + $0x10] sm:$0xff]
    %v692 = vld [vmem:[%s688 + $0x18] sm:$0xff]
    %v693 = vld [vmem:[%s688 + $0x20] sm:$0xff]
    %v694 = vld [vmem:[%s688 + $0x28] sm:$0xff]
    %v695 = vld [vmem:[%s688 + $0x30] sm:$0xff]
    %v696 = vld [vmem:[%s688 + $0x38] sm:$0xff]
    %v697 = vld [vmem:[%s688 + $0x40] sm:$0xff]
    %v698 = vld [vmem:[%s688 + $0x48] sm:$0xff]
    %v699 = vld [vmem:[%s688 + $0x50] sm:$0xff]
    %v700 = vld [vmem:[%s688 + $0x58] sm:$0xff]
    %v701 = vld [vmem:[%s688 + $0x60] sm:$0xff]
    %v702 = vld [vmem:[%s688 + $0x68] sm:$0xff]
    %v703 = vld [vmem:[%s688 + $0x70] sm:$0xff]
    %v704 = vld [vmem:[%s688 + $0x78] sm:$0xff]
    %v705 = vmul.f32 %v684, %v689
    %v706 = vmul.f32 %v680, %v690
    %v707 = vmul.f32 %v676, %v691
    %v708 = vmul.f32 %v672, %v692
    %v709 = vmul.f32 %v685, %v693
    %v710 = vmul.f32 %v681, %v694
    %v711 = vmul.f32 %v677, %v695
    %v712 = vmul.f32 %v673, %v696
    %v713 = vmul.f32 %v686, %v697
    %v714 = vmul.f32 %v682, %v698
    %v715 = vmul.f32 %v678, %v699
    %v716 = vmul.f32 %v674, %v700
    %v717 = vmul.f32 %v687, %v701
    %v718 = vmul.f32 %v683, %v702
    %v719 = vmul.f32 %v679, %v703
    %v720 = vmul.f32 %v675, %v704
    %v721 = vadd.f32 %v623, %v705
    %v722 = vadd.f32 %v624, %v706
    %v723 = vadd.f32 %v625, %v707
    %v724 = vadd.f32 %v626, %v708
    %v725 = vadd.f32 %v627, %v709
    %v726 = vadd.f32 %v628, %v710
    %v727 = vadd.f32 %v629, %v711
    %v728 = vadd.f32 %v630, %v712
    %v729 = vadd.f32 %v631, %v713
    %v730 = vadd.f32 %v632, %v714
    %v731 = vadd.f32 %v633, %v715
    %v732 = vadd.f32 %v634, %v716
    %v733 = vadd.f32 %v635, %v717
    %v734 = vadd.f32 %v636, %v718
    %v735 = vadd.f32 %v637, %v719
    %v736 = vadd.f32 %v638, %v720
    %s737 = scalar_lea.vmem [#allocation2], 512
    %v738 = vld [vmem:[%s737] sm:$0xff]
    %v739 = vld [vmem:[%s737 + $0x8] sm:$0xff]
    %v740 = vld [vmem:[%s737 + $0x10] sm:$0xff]
    %v741 = vld [vmem:[%s737 + $0x18] sm:$0xff]
    %v742 = vld [vmem:[%s737 + $0x20] sm:$0xff]
    %v743 = vld [vmem:[%s737 + $0x28] sm:$0xff]
    %v744 = vld [vmem:[%s737 + $0x30] sm:$0xff]
    %v745 = vld [vmem:[%s737 + $0x38] sm:$0xff]
    %v746 = vld [vmem:[%s737 + $0x40] sm:$0xff]
    %v747 = vld [vmem:[%s737 + $0x48] sm:$0xff]
    %v748 = vld [vmem:[%s737 + $0x50] sm:$0xff]
    %v749 = vld [vmem:[%s737 + $0x58] sm:$0xff]
    %v750 = vld [vmem:[%s737 + $0x60] sm:$0xff]
    %v751 = vld [vmem:[%s737 + $0x68] sm:$0xff]
    %v752 = vld [vmem:[%s737 + $0x70] sm:$0xff]
    %v753 = vld [vmem:[%s737 + $0x78] sm:$0xff]
    %v754 = vmul.f32 %v344, %v738
    %v755 = vmul.f32 %v345, %v739
    %v756 = vmul.f32 %v346, %v740
    %v757 = vmul.f32 %v347, %v741
    %v758 = vmul.f32 %v348, %v742
    %v759 = vmul.f32 %v349, %v743
    %v760 = vmul.f32 %v350, %v744
    %v761 = vmul.f32 %v351, %v745
    %v762 = vmul.f32 %v352, %v746
    %v763 = vmul.f32 %v353, %v747
    %v764 = vmul.f32 %v354, %v748
    %v765 = vmul.f32 %v355, %v749
    %v766 = vmul.f32 %v356, %v750
    %v767 = vmul.f32 %v357, %v751
    %v768 = vmul.f32 %v358, %v752
    %v769 = vmul.f32 %v359, %v753
    %v770 = vadd.f32 %v721, %v754
    %v771 = vadd.f32 %v722, %v755
    %v772 = vadd.f32 %v723, %v756
    %v773 = vadd.f32 %v724, %v757
    %v774 = vadd.f32 %v725, %v758
    %v775 = vadd.f32 %v726, %v759
    %v776 = vadd.f32 %v727, %v760
    %v777 = vadd.f32 %v728, %v761
    %v778 = vadd.f32 %v729, %v762
    %v779 = vadd.f32 %v730, %v763
    %v780 = vadd.f32 %v731, %v764
    %v781 = vadd.f32 %v732, %v765
    %v782 = vadd.f32 %v733, %v766
    %v783 = vadd.f32 %v734, %v767
    %v784 = vadd.f32 %v735, %v768
    %v785 = vadd.f32 %v736, %v769
    %786 = vrot.lane.b32.xlu0 %v344, 127
    %v787 = vpop.permute.xlu0 %786
    %788 = vrot.lane.b32.xlu0 %v348, 127
    %v789 = vpop.permute.xlu0 %788
    %790 = vrot.lane.b32.xlu0 %v352, 127
    %v791 = vpop.permute.xlu0 %790
    %792 = vrot.lane.b32.xlu0 %v356, 127
    %v793 = vpop.permute.xlu0 %792
    %794 = vrot.lane.b32.xlu0 %v345, 127
    %v795 = vpop.permute.xlu0 %794
    %796 = vrot.lane.b32.xlu0 %v349, 127
    %v797 = vpop.permute.xlu0 %796
    %798 = vrot.lane.b32.xlu0 %v353, 127
    %v799 = vpop.permute.xlu0 %798
    %800 = vrot.lane.b32.xlu0 %v357, 127
    %v801 = vpop.permute.xlu0 %800
    %802 = vrot.lane.b32.xlu0 %v346, 127
    %v803 = vpop.permute.xlu0 %802
    %804 = vrot.lane.b32.xlu0 %v350, 127
    %v805 = vpop.permute.xlu0 %804
    %806 = vrot.lane.b32.xlu0 %v354, 127
    %v807 = vpop.permute.xlu0 %806
    %808 = vrot.lane.b32.xlu0 %v358, 127
    %v809 = vpop.permute.xlu0 %808
    %810 = vrot.lane.b32.xlu0 %v347, 127
    %v811 = vpop.permute.xlu0 %810
    %812 = vrot.lane.b32.xlu0 %v351, 127
    %v813 = vpop.permute.xlu0 %812
    %814 = vrot.lane.b32.xlu0 %v355, 127
    %v815 = vpop.permute.xlu0 %814
    %816 = vrot.lane.b32.xlu0 %v359, 127
    %v817 = vpop.permute.xlu0 %816
    %vm818 = vcmp.lt.s32.totalorder %v393, 127
    %v819 = vsel %vm818, %v803, %v811
    %v820 = vsel %vm818, %v805, %v813
    %v821 = vsel %vm818, %v807, %v815
    %v822 = vsel %vm818, %v809, %v817
    %v823 = vsel %vm818, %v795, %v803
    %v824 = vsel %vm818, %v797, %v805
    %v825 = vsel %vm818, %v799, %v807
    %v826 = vsel %vm818, %v801, %v809
    %v827 = vsel %vm818, %v787, %v795
    %v828 = vsel %vm818, %v789, %v797
    %v829 = vsel %vm818, %v791, %v799
    %v830 = vsel %vm818, %v793, %v801
    %v831 = vsel %vm818, %v811, %v787
    %v832 = vsel %vm818, %v813, %v789
    %v833 = vsel %vm818, %v815, %v791
    %v834 = vsel %vm818, %v817, %v793
    %s835 = scalar_lea.vmem [#allocation2], 640
    %v836 = vld [vmem:[%s835] sm:$0xff]
    %v837 = vld [vmem:[%s835 + $0x8] sm:$0xff]
    %v838 = vld [vmem:[%s835 + $0x10] sm:$0xff]
    %v839 = vld [vmem:[%s835 + $0x18] sm:$0xff]
    %v840 = vld [vmem:[%s835 + $0x20] sm:$0xff]
    %v841 = vld [vmem:[%s835 + $0x28] sm:$0xff]
    %v842 = vld [vmem:[%s835 + $0x30] sm:$0xff]
    %v843 = vld [vmem:[%s835 + $0x38] sm:$0xff]
    %v844 = vld [vmem:[%s835 + $0x40] sm:$0xff]
    %v845 = vld [vmem:[%s835 + $0x48] sm:$0xff]
    %v846 = vld [vmem:[%s835 + $0x50] sm:$0xff]
    %v847 = vld [vmem:[%s835 + $0x58] sm:$0xff]
    %v848 = vld [vmem:[%s835 + $0x60] sm:$0xff]
    %v849 = vld [vmem:[%s835 + $0x68] sm:$0xff]
    %v850 = vld [vmem:[%s835 + $0x70] sm:$0xff]
    %v851 = vld [vmem:[%s835 + $0x78] sm:$0xff]
    %v852 = vmul.f32 %v827, %v836
    %v853 = vmul.f32 %v823, %v837
    %v854 = vmul.f32 %v819, %v838
    %v855 = vmul.f32 %v831, %v839
    %v856 = vmul.f32 %v828, %v840
    %v857 = vmul.f32 %v824, %v841
    %v858 = vmul.f32 %v820, %v842
    %v859 = vmul.f32 %v832, %v843
    %v860 = vmul.f32 %v829, %v844
    %v861 = vmul.f32 %v825, %v845
    %v862 = vmul.f32 %v821, %v846
    %v863 = vmul.f32 %v833, %v847
    %v864 = vmul.f32 %v830, %v848
    %v865 = vmul.f32 %v826, %v849
    %v866 = vmul.f32 %v822, %v850
    %v867 = vmul.f32 %v834, %v851
    %v868 = vadd.f32 %v770, %v852
    %v869 = vadd.f32 %v771, %v853
    %v870 = vadd.f32 %v772, %v854
    %v871 = vadd.f32 %v773, %v855
    %v872 = vadd.f32 %v774, %v856
    %v873 = vadd.f32 %v775, %v857
    %v874 = vadd.f32 %v776, %v858
    %v875 = vadd.f32 %v777, %v859
    %v876 = vadd.f32 %v778, %v860
    %v877 = vadd.f32 %v779, %v861
    %v878 = vadd.f32 %v780, %v862
    %v879 = vadd.f32 %v781, %v863
    %v880 = vadd.f32 %v782, %v864
    %v881 = vadd.f32 %v783, %v865
    %v882 = vadd.f32 %v784, %v866
    %v883 = vadd.f32 %v785, %v867
    %884 = vrot.lane.b32.xlu0 %v344, 113
    %v885 = vpop.permute.xlu0 %884
    %886 = vrot.lane.b32.xlu0 %v348, 113
    %v887 = vpop.permute.xlu0 %886
    %888 = vrot.lane.b32.xlu0 %v352, 113
    %v889 = vpop.permute.xlu0 %888
    %890 = vrot.lane.b32.xlu0 %v356, 113
    %v891 = vpop.permute.xlu0 %890
    %892 = vrot.lane.b32.xlu0 %v345, 113
    %v893 = vpop.permute.xlu0 %892
    %894 = vrot.lane.b32.xlu0 %v349, 113
    %v895 = vpop.permute.xlu0 %894
    %896 = vrot.lane.b32.xlu0 %v353, 113
    %v897 = vpop.permute.xlu0 %896
    %898 = vrot.lane.b32.xlu0 %v357, 113
    %v899 = vpop.permute.xlu0 %898
    %900 = vrot.lane.b32.xlu0 %v346, 113
    %v901 = vpop.permute.xlu0 %900
    %902 = vrot.lane.b32.xlu0 %v350, 113
    %v903 = vpop.permute.xlu0 %902
    %904 = vrot.lane.b32.xlu0 %v354, 113
    %v905 = vpop.permute.xlu0 %904
    %906 = vrot.lane.b32.xlu0 %v358, 113
    %v907 = vpop.permute.xlu0 %906
    %908 = vrot.lane.b32.xlu0 %v347, 113
    %v909 = vpop.permute.xlu0 %908
    %910 = vrot.lane.b32.xlu0 %v351, 113
    %v911 = vpop.permute.xlu0 %910
    %912 = vrot.lane.b32.xlu0 %v355, 113
    %v913 = vpop.permute.xlu0 %912
    %914 = vrot.lane.b32.xlu0 %v359, 113
    %v915 = vpop.permute.xlu0 %914
    %vm916 = vcmp.lt.s32.totalorder %v393, 113
    %v917 = vsel %vm916, %v901, %v909
    %v918 = vsel %vm916, %v903, %v911
    %v919 = vsel %vm916, %v905, %v913
    %v920 = vsel %vm916, %v907, %v915
    %v921 = vsel %vm916, %v893, %v901
    %v922 = vsel %vm916, %v895, %v903
    %v923 = vsel %vm916, %v897, %v905
    %v924 = vsel %vm916, %v899, %v907
    %v925 = vsel %vm916, %v885, %v893
    %v926 = vsel %vm916, %v887, %v895
    %v927 = vsel %vm916, %v889, %v897
    %v928 = vsel %vm916, %v891, %v899
    %v929 = vsel %vm916, %v909, %v885
    %v930 = vsel %vm916, %v911, %v887
    %v931 = vsel %vm916, %v913, %v889
    %v932 = vsel %vm916, %v915, %v891
    %s933 = scalar_lea.vmem [#allocation2], 768
    %v934 = vld [vmem:[%s933] sm:$0xff]
    %v935 = vld [vmem:[%s933 + $0x8] sm:$0xff]
    %v936 = vld [vmem:[%s933 + $0x10] sm:$0xff]
    %v937 = vld [vmem:[%s933 + $0x18] sm:$0xff]
    %v938 = vld [vmem:[%s933 + $0x20] sm:$0xff]
    %v939 = vld [vmem:[%s933 + $0x28] sm:$0xff]
    %v940 = vld [vmem:[%s933 + $0x30] sm:$0xff]
    %v941 = vld [vmem:[%s933 + $0x38] sm:$0xff]
    %v942 = vld [vmem:[%s933 + $0x40] sm:$0xff]
    %v943 = vld [vmem:[%s933 + $0x48] sm:$0xff]
    %v944 = vld [vmem:[%s933 + $0x50] sm:$0xff]
    %v945 = vld [vmem:[%s933 + $0x58] sm:$0xff]
    %v946 = vld [vmem:[%s933 + $0x60] sm:$0xff]
    %v947 = vld [vmem:[%s933 + $0x68] sm:$0xff]
    %v948 = vld [vmem:[%s933 + $0x70] sm:$0xff]
    %v949 = vld [vmem:[%s933 + $0x78] sm:$0xff]
    %v950 = vmul.f32 %v925, %v934
    %v951 = vmul.f32 %v921, %v935
    %v952 = vmul.f32 %v917, %v936
    %v953 = vmul.f32 %v929, %v937
    %v954 = vmul.f32 %v926, %v938
    %v955 = vmul.f32 %v922, %v939
    %v956 = vmul.f32 %v918, %v940
    %v957 = vmul.f32 %v930, %v941
    %v958 = vmul.f32 %v927, %v942
    %v959 = vmul.f32 %v923, %v943
    %v960 = vmul.f32 %v919, %v944
    %v961 = vmul.f32 %v931, %v945
    %v962 = vmul.f32 %v928, %v946
    %v963 = vmul.f32 %v924, %v947
    %v964 = vmul.f32 %v920, %v948
    %v965 = vmul.f32 %v932, %v949
    %v966 = vadd.f32 %v868, %v950
    %v967 = vadd.f32 %v869, %v951
    %v968 = vadd.f32 %v870, %v952
    %v969 = vadd.f32 %v871, %v953
    %v970 = vadd.f32 %v872, %v954
    %v971 = vadd.f32 %v873, %v955
    %v972 = vadd.f32 %v874, %v956
    %v973 = vadd.f32 %v875, %v957
    %v974 = vadd.f32 %v876, %v958
    %v975 = vadd.f32 %v877, %v959
    %v976 = vadd.f32 %v878, %v960
    %v977 = vadd.f32 %v879, %v961
    %v978 = vadd.f32 %v880, %v962
    %v979 = vadd.f32 %v881, %v963
    %v980 = vadd.f32 %v882, %v964
    %v981 = vadd.f32 %v883, %v965
    %982 = vrot.lane.b32.xlu0 %v344, 112
    %v983 = vpop.permute.xlu0 %982
    %984 = vrot.lane.b32.xlu0 %v348, 112
    %v985 = vpop.permute.xlu0 %984
    %986 = vrot.lane.b32.xlu0 %v352, 112
    %v987 = vpop.permute.xlu0 %986
    %988 = vrot.lane.b32.xlu0 %v356, 112
    %v989 = vpop.permute.xlu0 %988
    %990 = vrot.lane.b32.xlu0 %v345, 112
    %v991 = vpop.permute.xlu0 %990
    %992 = vrot.lane.b32.xlu0 %v349, 112
    %v993 = vpop.permute.xlu0 %992
    %994 = vrot.lane.b32.xlu0 %v353, 112
    %v995 = vpop.permute.xlu0 %994
    %996 = vrot.lane.b32.xlu0 %v357, 112
    %v997 = vpop.permute.xlu0 %996
    %998 = vrot.lane.b32.xlu0 %v346, 112
    %v999 = vpop.permute.xlu0 %998
    %1000 = vrot.lane.b32.xlu0 %v350, 112
    %v1001 = vpop.permute.xlu0 %1000
    %1002 = vrot.lane.b32.xlu0 %v354, 112
    %v1003 = vpop.permute.xlu0 %1002
    %1004 = vrot.lane.b32.xlu0 %v358, 112
    %v1005 = vpop.permute.xlu0 %1004
    %1006 = vrot.lane.b32.xlu0 %v347, 112
    %v1007 = vpop.permute.xlu0 %1006
    %1008 = vrot.lane.b32.xlu0 %v351, 112
    %v1009 = vpop.permute.xlu0 %1008
    %1010 = vrot.lane.b32.xlu0 %v355, 112
    %v1011 = vpop.permute.xlu0 %1010
    %1012 = vrot.lane.b32.xlu0 %v359, 112
    %v1013 = vpop.permute.xlu0 %1012
    %vm1014 = vcmp.lt.s32.totalorder %v393, 112
    %v1015 = vsel %vm1014, %v999, %v1007
    %v1016 = vsel %vm1014, %v1001, %v1009
    %v1017 = vsel %vm1014, %v1003, %v1011
    %v1018 = vsel %vm1014, %v1005, %v1013
    %v1019 = vsel %vm1014, %v991, %v999
    %v1020 = vsel %vm1014, %v993, %v1001
    %v1021 = vsel %vm1014, %v995, %v1003
    %v1022 = vsel %vm1014, %v997, %v1005
    %v1023 = vsel %vm1014, %v983, %v991
    %v1024 = vsel %vm1014, %v985, %v993
    %v1025 = vsel %vm1014, %v987, %v995
    %v1026 = vsel %vm1014, %v989, %v997
    %v1027 = vsel %vm1014, %v1007, %v983
    %v1028 = vsel %vm1014, %v1009, %v985
    %v1029 = vsel %vm1014, %v1011, %v987
    %v1030 = vsel %vm1014, %v1013, %v989
    %s1031 = scalar_lea.vmem [#allocation2], 896
    %v1032 = vld [vmem:[%s1031] sm:$0xff]
    %v1033 = vld [vmem:[%s1031 + $0x8] sm:$0xff]
    %v1034 = vld [vmem:[%s1031 + $0x10] sm:$0xff]
    %v1035 = vld [vmem:[%s1031 + $0x18] sm:$0xff]
    %v1036 = vld [vmem:[%s1031 + $0x20] sm:$0xff]
    %v1037 = vld [vmem:[%s1031 + $0x28] sm:$0xff]
    %v1038 = vld [vmem:[%s1031 + $0x30] sm:$0xff]
    %v1039 = vld [vmem:[%s1031 + $0x38] sm:$0xff]
    %v1040 = vld [vmem:[%s1031 + $0x40] sm:$0xff]
    %v1041 = vld [vmem:[%s1031 + $0x48] sm:$0xff]
    %v1042 = vld [vmem:[%s1031 + $0x50] sm:$0xff]
    %v1043 = vld [vmem:[%s1031 + $0x58] sm:$0xff]
    %v1044 = vld [vmem:[%s1031 + $0x60] sm:$0xff]
    %v1045 = vld [vmem:[%s1031 + $0x68] sm:$0xff]
    %v1046 = vld [vmem:[%s1031 + $0x70] sm:$0xff]
    %v1047 = vld [vmem:[%s1031 + $0x78] sm:$0xff]
    %v1048 = vmul.f32 %v1023, %v1032
    %v1049 = vmul.f32 %v1019, %v1033
    %v1050 = vmul.f32 %v1015, %v1034
    %v1051 = vmul.f32 %v1027, %v1035
    %v1052 = vmul.f32 %v1024, %v1036
    %v1053 = vmul.f32 %v1020, %v1037
    %v1054 = vmul.f32 %v1016, %v1038
    %v1055 = vmul.f32 %v1028, %v1039
    %v1056 = vmul.f32 %v1025, %v1040
    %v1057 = vmul.f32 %v1021, %v1041
    %v1058 = vmul.f32 %v1017, %v1042
    %v1059 = vmul.f32 %v1029, %v1043
    %v1060 = vmul.f32 %v1026, %v1044
    %v1061 = vmul.f32 %v1022, %v1045
    %v1062 = vmul.f32 %v1018, %v1046
    %v1063 = vmul.f32 %v1030, %v1047
    %v1064 = vadd.f32 %v966, %v1048
    %v1065 = vadd.f32 %v967, %v1049
    %v1066 = vadd.f32 %v968, %v1050
    %v1067 = vadd.f32 %v969, %v1051
    %v1068 = vadd.f32 %v970, %v1052
    %v1069 = vadd.f32 %v971, %v1053
    %v1070 = vadd.f32 %v972, %v1054
    %v1071 = vadd.f32 %v973, %v1055
    %v1072 = vadd.f32 %v974, %v1056
    %v1073 = vadd.f32 %v975, %v1057
    %v1074 = vadd.f32 %v976, %v1058
    %v1075 = vadd.f32 %v977, %v1059
    %v1076 = vadd.f32 %v978, %v1060
    %v1077 = vadd.f32 %v979, %v1061
    %v1078 = vadd.f32 %v980, %v1062
    %v1079 = vadd.f32 %v981, %v1063
    %1080 = vrot.lane.b32.xlu0 %v344, 111
    %v1081 = vpop.permute.xlu0 %1080
    %1082 = vrot.lane.b32.xlu0 %v348, 111
    %v1083 = vpop.permute.xlu0 %1082
    %1084 = vrot.lane.b32.xlu0 %v352, 111
    %v1085 = vpop.permute.xlu0 %1084
    %1086 = vrot.lane.b32.xlu0 %v356, 111
    %v1087 = vpop.permute.xlu0 %1086
    %1088 = vrot.lane.b32.xlu0 %v345, 111
    %v1089 = vpop.permute.xlu0 %1088
    %1090 = vrot.lane.b32.xlu0 %v349, 111
    %v1091 = vpop.permute.xlu0 %1090
    %1092 = vrot.lane.b32.xlu0 %v353, 111
    %v1093 = vpop.permute.xlu0 %1092
    %1094 = vrot.lane.b32.xlu0 %v357, 111
    %v1095 = vpop.permute.xlu0 %1094
    %1096 = vrot.lane.b32.xlu0 %v346, 111
    %v1097 = vpop.permute.xlu0 %1096
    %1098 = vrot.lane.b32.xlu0 %v350, 111
    %v1099 = vpop.permute.xlu0 %1098
    %1100 = vrot.lane.b32.xlu0 %v354, 111
    %v1101 = vpop.permute.xlu0 %1100
    %1102 = vrot.lane.b32.xlu0 %v358, 111
    %v1103 = vpop.permute.xlu0 %1102
    %1104 = vrot.lane.b32.xlu0 %v347, 111
    %v1105 = vpop.permute.xlu0 %1104
    %1106 = vrot.lane.b32.xlu0 %v351, 111
    %v1107 = vpop.permute.xlu0 %1106
    %1108 = vrot.lane.b32.xlu0 %v355, 111
    %v1109 = vpop.permute.xlu0 %1108
    %1110 = vrot.lane.b32.xlu0 %v359, 111
    %v1111 = vpop.permute.xlu0 %1110
    %vm1112 = vcmp.lt.s32.totalorder %v393, 111
    %v1113 = vsel %vm1112, %v1097, %v1105
    %v1114 = vsel %vm1112, %v1099, %v1107
    %v1115 = vsel %vm1112, %v1101, %v1109
    %v1116 = vsel %vm1112, %v1103, %v1111
    %v1117 = vsel %vm1112, %v1089, %v1097
    %v1118 = vsel %vm1112, %v1091, %v1099
    %v1119 = vsel %vm1112, %v1093, %v1101
    %v1120 = vsel %vm1112, %v1095, %v1103
    %v1121 = vsel %vm1112, %v1081, %v1089
    %v1122 = vsel %vm1112, %v1083, %v1091
    %v1123 = vsel %vm1112, %v1085, %v1093
    %v1124 = vsel %vm1112, %v1087, %v1095
    %v1125 = vsel %vm1112, %v1105, %v1081
    %v1126 = vsel %vm1112, %v1107, %v1083
    %v1127 = vsel %vm1112, %v1109, %v1085
    %v1128 = vsel %vm1112, %v1111, %v1087
    %s1129 = scalar_lea.vmem [#allocation2], 1024
    %v1130 = vld [vmem:[%s1129] sm:$0xff]
    %v1131 = vld [vmem:[%s1129 + $0x8] sm:$0xff]
    %v1132 = vld [vmem:[%s1129 + $0x10] sm:$0xff]
    %v1133 = vld [vmem:[%s1129 + $0x18] sm:$0xff]
    %v1134 = vld [vmem:[%s1129 + $0x20] sm:$0xff]
    %v1135 = vld [vmem:[%s1129 + $0x28] sm:$0xff]
    %v1136 = vld [vmem:[%s1129 + $0x30] sm:$0xff]
    %v1137 = vld [vmem:[%s1129 + $0x38] sm:$0xff]
    %v1138 = vld [vmem:[%s1129 + $0x40] sm:$0xff]
    %v1139 = vld [vmem:[%s1129 + $0x48] sm:$0xff]
    %v1140 = vld [vmem:[%s1129 + $0x50] sm:$0xff]
    %v1141 = vld [vmem:[%s1129 + $0x58] sm:$0xff]
    %v1142 = vld [vmem:[%s1129 + $0x60] sm:$0xff]
    %v1143 = vld [vmem:[%s1129 + $0x68] sm:$0xff]
    %v1144 = vld [vmem:[%s1129 + $0x70] sm:$0xff]
    %v1145 = vld [vmem:[%s1129 + $0x78] sm:$0xff]
    %v1146 = vmul.f32 %v1121, %v1130
    %v1147 = vmul.f32 %v1117, %v1131
    %v1148 = vmul.f32 %v1113, %v1132
    %v1149 = vmul.f32 %v1125, %v1133
    %v1150 = vmul.f32 %v1122, %v1134
    %v1151 = vmul.f32 %v1118, %v1135
    %v1152 = vmul.f32 %v1114, %v1136
    %v1153 = vmul.f32 %v1126, %v1137
    %v1154 = vmul.f32 %v1123, %v1138
    %v1155 = vmul.f32 %v1119, %v1139
    %v1156 = vmul.f32 %v1115, %v1140
    %v1157 = vmul.f32 %v1127, %v1141
    %v1158 = vmul.f32 %v1124, %v1142
    %v1159 = vmul.f32 %v1120, %v1143
    %v1160 = vmul.f32 %v1116, %v1144
    %v1161 = vmul.f32 %v1128, %v1145
    %v1162 = vadd.f32 %v1064, %v1146
    %v1163 = vadd.f32 %v1065, %v1147
    %v1164 = vadd.f32 %v1066, %v1148
    %v1165 = vadd.f32 %v1067, %v1149
    %v1166 = vadd.f32 %v1068, %v1150
    %v1167 = vadd.f32 %v1069, %v1151
    %v1168 = vadd.f32 %v1070, %v1152
    %v1169 = vadd.f32 %v1071, %v1153
    %v1170 = vadd.f32 %v1072, %v1154
    %v1171 = vadd.f32 %v1073, %v1155
    %v1172 = vadd.f32 %v1074, %v1156
    %v1173 = vadd.f32 %v1075, %v1157
    %v1174 = vadd.f32 %v1076, %v1158
    %v1175 = vadd.f32 %v1077, %v1159
    %v1176 = vadd.f32 %v1078, %v1160
    %v1177 = vadd.f32 %v1079, %v1161
    %1179 = vset.pattern.permute.xlu0 0
    %1180 = vperm.xlu0 %1179, %v56
    %v1181 = vpop.permute.xlu0 %1180
    %1184 = vset.pattern.permute.xlu0 0
    %1185 = vperm.xlu0 %1184, %v57
    %v1186 = vpop.permute.xlu0 %1185
    %1189 = vset.pattern.permute.xlu0 0
    %1190 = vperm.xlu0 %1189, %v58
    %v1191 = vpop.permute.xlu0 %1190
    %1194 = vset.pattern.permute.xlu0 0
    %1195 = vperm.xlu0 %1194, %v59
    %v1196 = vpop.permute.xlu0 %1195
    %v1198 = vadd.f32 %v1162, %v1181
    %v1199 = vadd.f32 %v1163, %v1181
    %v1200 = vadd.f32 %v1164, %v1181
    %v1201 = vadd.f32 %v1165, %v1181
    %v1202 = vadd.f32 %v1166, %v1186
    %v1203 = vadd.f32 %v1167, %v1186
    %v1204 = vadd.f32 %v1168, %v1186
    %v1205 = vadd.f32 %v1169, %v1186
    %v1206 = vadd.f32 %v1170, %v1191
    %v1207 = vadd.f32 %v1171, %v1191
    %v1208 = vadd.f32 %v1172, %v1191
    %v1209 = vadd.f32 %v1173, %v1191
    %v1210 = vadd.f32 %v1174, %v1196
    %v1211 = vadd.f32 %v1175, %v1196
    %v1212 = vadd.f32 %v1176, %v1196
    %v1213 = vadd.f32 %v1177, %v1196
    %v1214 = vadd.f32 %v1198, %v1199
    %1215 = vadd.xlane.f32.xlu0 %v1214
    %v1216 = vpop.xlane.xlu0 %1215
    %v1217 = vadd.f32 %v1202, %v1203
    %1218 = vadd.xlane.f32.xlu0 %v1217
    %v1219 = vpop.xlane.xlu0 %1218
    %v1220 = vadd.f32 %v1206, %v1207
    %1221 = vadd.xlane.f32.xlu0 %v1220
    %v1222 = vpop.xlane.xlu0 %1221
    %v1223 = vadd.f32 %v1210, %v1211
    %1224 = vadd.xlane.f32.xlu0 %v1223
    %v1225 = vpop.xlane.xlu0 %1224
    %v1226 = vmul.f32 %v1216, 0.00390625
    %v1227 = vmul.f32 %v1219, 0.00390625
    %v1228 = vmul.f32 %v1222, 0.00390625
    %v1229 = vmul.f32 %v1225, 0.00390625
    %v1230 = vadd.f32 %v1200, %v1201
    %1231 = vadd.xlane.f32.xlu0 %v1230
    %v1232 = vpop.xlane.xlu0 %1231
    %v1233 = vadd.f32 %v1204, %v1205
    %1234 = vadd.xlane.f32.xlu0 %v1233
    %v1235 = vpop.xlane.xlu0 %1234
    %v1236 = vadd.f32 %v1208, %v1209
    %1237 = vadd.xlane.f32.xlu0 %v1236
    %v1238 = vpop.xlane.xlu0 %1237
    %v1239 = vadd.f32 %v1212, %v1213
    %1240 = vadd.xlane.f32.xlu0 %v1239
    %v1241 = vpop.xlane.xlu0 %1240
    %v1242 = vmul.f32 %v1232, 0.00390625
    %v1243 = vmul.f32 %v1235, 0.00390625
    %v1244 = vmul.f32 %v1238, 0.00390625
    %v1245 = vmul.f32 %v1241, 0.00390625
    %vm1246 = vcmask 7168
    %v1247 = vsel %vm1246, %v1226, %v1242
    %v1248 = vsel %vm1246, %v1227, %v1243
    %v1249 = vsel %vm1246, %v1228, %v1244
    %v1250 = vsel %vm1246, %v1229, %v1245
    %v1251 = vld [vmem:[%s4] sm:$0xff]
    %v1252 = vld [vmem:[%s5] sm:$0xff]
    %1254 = vset.pattern.permute.xlu0 0
    %1255 = vperm.xlu0 %1254, %v1252
    %v1256 = vpop.permute.xlu0 %1255
    %vm1258 = vcmask 261120
    %v1260 = vsel %vm1258, %v1251, 0
    %1262 = vmatprep.subr.mxu0 0.0
    %1263 = vmatpush1.msra.mxu0 %v1247
    %1264 = vmatprep.subr.mxu0 0.0
    %1265 = vmatpush1.msra.mxu0 %v1248
    %1266 = vmatprep.subr.mxu0 0.0
    %1267 = vmatpush1.msra.mxu0 %v1249
    %1268 = vmatprep.subr.mxu0 0.0
    %1269 = vmatpush1.msra.mxu0 %v1250
    %1270 = vmatprep.subr.mxu0 0.0
    %1271 = vmatpush1.msra.mxu0 0.0
    %1272 = vmatprep.subr.mxu0 0.0
    %1273 = vmatpush1.msra.mxu0 0.0
    %1274 = vmatprep.subr.mxu0 0.0
    %1275 = vmatpush1.msra.mxu0 0.0
    %1276 = vmatprep.subr.mxu0 0.0
    %1277 = vmatpush1.msra.mxu0 0.0
    %1278 = vmatprep.subr.mxu0 0.0
    %1279 = vmatpush1.msra.mxu0 0.0
    %1280 = vmatprep.subr.mxu0 0.0
    %1281 = vmatpush1.msra.mxu0 0.0
    %1282 = vmatprep.subr.mxu0 0.0
    %1283 = vmatpush1.msra.mxu0 0.0
    %1284 = vmatprep.subr.mxu0 0.0
    %1285 = vmatpush1.msra.mxu0 0.0
    %1286 = vmatprep.subr.mxu0 0.0
    %1287 = vmatpush1.msra.mxu0 0.0
    %1288 = vmatprep.subr.mxu0 0.0
    %1289 = vmatpush1.msra.mxu0 0.0
    %1290 = vmatprep.subr.mxu0 0.0
    %1291 = vmatpush1.msra.mxu0 0.0
    %1292 = vmatprep.subr.mxu0 0.0
    %1293 = vmatpush1.msra.mxu0 0.0
    %1294 = vmatprep.subr.mxu0 0.0
    %1295 = vmatpush1.msra.mxu0 0.0
    %1296 = vmatprep.subr.mxu0 0.0
    %1297 = vmatpush1.msra.mxu0 0.0
    %1298 = vmatprep.subr.mxu0 0.0
    %1299 = vmatpush1.msra.mxu0 0.0
    %1300 = vmatprep.subr.mxu0 0.0
    %1301 = vmatpush1.msra.mxu0 0.0
    %1302 = vmatprep.subr.mxu0 0.0
    %1303 = vmatpush1.msra.mxu0 0.0
    %1304 = vmatprep.subr.mxu0 0.0
    %1305 = vmatpush1.msra.mxu0 0.0
    %1306 = vmatprep.subr.mxu0 0.0
    %1307 = vmatpush1.msra.mxu0 0.0
    %1308 = vmatprep.subr.mxu0 0.0
    %1309 = vmatpush1.msra.mxu0 0.0
    %1310 = vmatprep.subr.mxu0 0.0
    %1311 = vmatpush1.msra.mxu0 0.0
    %1312 = vmatprep.subr.mxu0 0.0
    %1313 = vmatpush1.msra.mxu0 0.0
    %1314 = vmatprep.subr.mxu0 0.0
    %1315 = vmatpush1.msra.mxu0 0.0
    %1316 = vmatprep.subr.mxu0 0.0
    %1317 = vmatpush1.msra.mxu0 0.0
    %1318 = vmatprep.subr.mxu0 0.0
    %1319 = vmatpush1.msra.mxu0 0.0
    %1320 = vmatprep.subr.mxu0 0.0
    %1321 = vmatpush1.msra.mxu0 0.0
    %1322 = vmatprep.subr.mxu0 0.0
    %1323 = vmatpush1.msra.mxu0 0.0
    %1324 = vmatprep.subr.mxu0 0.0
    %1325 = vmatpush1.msra.mxu0 0.0
    %1326 = vmatprep.mubr.f32.mxu0 0.0
    %1327 = vmatmul.mubr.f32.gmra.mrb[0].mxu0 %v1260
    %v1328 = vpop.f32.mrb[0].mxu0
    %v1329 = vadd.f32 %v1256, %v1328
    %v1330 = vpop.f32.mrb[0].mxu0
    %1331 = vdwg.mxu0
    %v1332 = vmax.f32 %v1329, 0.0
    %v1333 = vld [vmem:[%s6] sm:$0xff]
    %v1334 = vld [vmem:[%s6 + $0x8] sm:$0xff]
    %v1335 = vld [vmem:[%s6 + $0x10] sm:$0xff]
    %v1336 = vld [vmem:[%s6 + $0x18] sm:$0xff]
    %1338 = vset.pattern.permute.xlu0 0
    %1339 = vperm.xlu0 %1338, %v61
    %v1340 = vpop.permute.xlu0 %1339
    %1343 = vset.pattern.permute.xlu0 0
    %1344 = vperm.xlu0 %1343, %v62
    %v1345 = vpop.permute.xlu0 %1344
    %1348 = vset.pattern.permute.xlu0 0
    %1349 = vperm.xlu0 %1348, %v63
    %v1350 = vpop.permute.xlu0 %1349
    %1353 = vset.pattern.permute.xlu0 0
    %1354 = vperm.xlu0 %1353, %v64
    %v1355 = vpop.permute.xlu0 %1354
    %v1358 = vsel %vm89, %v1333, 0
    %v1361 = vsel %vm89, %v1334, 0
    %v1364 = vsel %vm89, %v1335, 0
    %v1367 = vsel %vm89, %v1336, 0
    %1369 = vmatprep.subr.mxu0 0.0
    %1370 = vmatpush1.msra.mxu0 %v1332
    %1371 = vmatprep.subr.mxu0 0.0
    %1372 = vmatpush1.msra.mxu0 0.0
    %1373 = vmatprep.subr.mxu0 0.0
    %1374 = vmatpush1.msra.mxu0 0.0
    %1375 = vmatprep.subr.mxu0 0.0
    %1376 = vmatpush1.msra.mxu0 0.0
    %1377 = vmatprep.subr.mxu0 0.0
    %1378 = vmatpush1.msra.mxu0 0.0
    %1379 = vmatprep.subr.mxu0 0.0
    %1380 = vmatpush1.msra.mxu0 0.0
    %1381 = vmatprep.subr.mxu0 0.0
    %1382 = vmatpush1.msra.mxu0 0.0
    %1383 = vmatprep.subr.mxu0 0.0
    %1384 = vmatpush1.msra.mxu0 0.0
    %1385 = vmatprep.subr.mxu0 0.0
    %1386 = vmatpush1.msra.mxu0 0.0
    %1387 = vmatprep.subr.mxu0 0.0
    %1388 = vmatpush1.msra.mxu0 0.0
    %1389 = vmatprep.subr.mxu0 0.0
    %1390 = vmatpush1.msra.mxu0 0.0
    %1391 = vmatprep.subr.mxu0 0.0
    %1392 = vmatpush1.msra.mxu0 0.0
    %1393 = vmatprep.subr.mxu0 0.0
    %1394 = vmatpush1.msra.mxu0 0.0
    %1395 = vmatprep.subr.mxu0 0.0
    %1396 = vmatpush1.msra.mxu0 0.0
    %1397 = vmatprep.subr.mxu0 0.0
    %1398 = vmatpush1.msra.mxu0 0.0
    %1399 = vmatprep.subr.mxu0 0.0
    %1400 = vmatpush1.msra.mxu0 0.0
    %1401 = vmatprep.subr.mxu0 0.0
    %1402 = vmatpush1.msra.mxu0 0.0
    %1403 = vmatprep.subr.mxu0 0.0
    %1404 = vmatpush1.msra.mxu0 0.0
    %1405 = vmatprep.subr.mxu0 0.0
    %1406 = vmatpush1.msra.mxu0 0.0
    %1407 = vmatprep.subr.mxu0 0.0
    %1408 = vmatpush1.msra.mxu0 0.0
    %1409 = vmatprep.subr.mxu0 0.0
    %1410 = vmatpush1.msra.mxu0 0.0
    %1411 = vmatprep.subr.mxu0 0.0
    %1412 = vmatpush1.msra.mxu0 0.0
    %1413 = vmatprep.subr.mxu0 0.0
    %1414 = vmatpush1.msra.mxu0 0.0
    %1415 = vmatprep.subr.mxu0 0.0
    %1416 = vmatpush1.msra.mxu0 0.0
    %1417 = vmatprep.subr.mxu0 0.0
    %1418 = vmatpush1.msra.mxu0 0.0
    %1419 = vmatprep.subr.mxu0 0.0
    %1420 = vmatpush1.msra.mxu0 0.0
    %1421 = vmatprep.subr.mxu0 0.0
    %1422 = vmatpush1.msra.mxu0 0.0
    %1423 = vmatprep.subr.mxu0 0.0
    %1424 = vmatpush1.msra.mxu0 0.0
    %1425 = vmatprep.subr.mxu0 0.0
    %1426 = vmatpush1.msra.mxu0 0.0
    %1427 = vmatprep.subr.mxu0 0.0
    %1428 = vmatpush1.msra.mxu0 0.0
    %1429 = vmatprep.subr.mxu0 0.0
    %1430 = vmatpush1.msra.mxu0 0.0
    %1431 = vmatprep.subr.mxu0 0.0
    %1432 = vmatpush1.msra.mxu0 0.0
    %1433 = vmatprep.mubr.f32.mxu0 0.0
    %1434 = vmatmul.mubr.f32.gmra.mrb[0].mxu0 %v1358
    %v1435 = vpop.f32.mrb[0].mxu0
    %v1436 = vadd.f32 %v1340, %v1435
    %v1437 = vpop.f32.mrb[0].mxu0
    %1438 = vmatprep.mubr.f32.mxu0 0.0
    %1439 = vmatmul.mubr.f32.gmra.mrb[0].mxu0 %v1361
    %v1440 = vpop.f32.mrb[0].mxu0
    %v1441 = vadd.f32 %v1345, %v1440
    %v1442 = vpop.f32.mrb[0].mxu0
    %1443 = vmatprep.mubr.f32.mxu0 0.0
    %1444 = vmatmul.mubr.f32.gmra.mrb[0].mxu0 %v1364
    %v1445 = vpop.f32.mrb[0].mxu0
    %v1446 = vadd.f32 %v1350, %v1445
    %v1447 = vpop.f32.mrb[0].mxu0
    %1448 = vmatprep.mubr.f32.mxu0 0.0
    %1449 = vmatmul.mubr.f32.gmra.mrb[0].mxu0 %v1367
    %v1450 = vpop.f32.mrb[0].mxu0
    %v1451 = vadd.f32 %v1355, %v1450
    %v1452 = vpop.f32.mrb[0].mxu0
    %1453 = vdwg.mxu0
    %v1454 = vadd.f32 %v1436, 3.0
    %v1455 = vadd.f32 %v1441, 3.0
    %v1456 = vadd.f32 %v1446, 3.0
    %v1457 = vadd.f32 %v1451, 3.0
    %v1458 = vmax.f32 %v1454, 0.0
    %v1459 = vmax.f32 %v1455, 0.0
    %v1460 = vmax.f32 %v1456, 0.0
    %v1461 = vmax.f32 %v1457, 0.0
    %v1462 = vmin.f32 %v1458, 6.0
    %v1463 = vmin.f32 %v1459, 6.0
    %v1464 = vmin.f32 %v1460, 6.0
    %v1465 = vmin.f32 %v1461, 6.0
    %v1466 = vmul.f32 %v1462, 0.16666667
    %v1467 = vmul.f32 %v1463, 0.16666667
    %v1468 = vmul.f32 %v1464, 0.16666667
    %v1469 = vmul.f32 %v1465, 0.16666667
    %1471 = vset.pattern.permute.xlu0 0
    %1472 = vperm.xlu0 %1471, %v1466
    %v1473 = vpop.permute.xlu0 %1472
    %1476 = vset.pattern.permute.xlu0 0
    %1477 = vperm.xlu0 %1476, %v1467
    %v1478 = vpop.permute.xlu0 %1477
    %1481 = vset.pattern.permute.xlu0 0
    %1482 = vperm.xlu0 %1481, %v1468
    %v1483 = vpop.permute.xlu0 %1482
    %1486 = vset.pattern.permute.xlu0 0
    %1487 = vperm.xlu0 %1486, %v1469
    %v1488 = vpop.permute.xlu0 %1487
    %v1490 = vmul.f32 %v1198, %v1473
    %v1491 = vmul.f32 %v1199, %v1473
    %v1492 = vmul.f32 %v1202, %v1478
    %v1493 = vmul.f32 %v1203, %v1478
    %v1494 = vmul.f32 %v1206, %v1483
    %v1495 = vmul.f32 %v1207, %v1483
    %v1496 = vmul.f32 %v1210, %v1488
    %v1497 = vmul.f32 %v1211, %v1488
    %1498 = vset.pattern.permute.xlu0 1
    %1499 = vperm.xlu0 %1498, %v1466
    %v1500 = vpop.permute.xlu0 %1499
    %1502 = vset.pattern.permute.xlu0 1
    %1503 = vperm.xlu0 %1502, %v1467
    %v1504 = vpop.permute.xlu0 %1503
    %1506 = vset.pattern.permute.xlu0 1
    %1507 = vperm.xlu0 %1506, %v1468
    %v1508 = vpop.permute.xlu0 %1507
    %1510 = vset.pattern.permute.xlu0 1
    %1511 = vperm.xlu0 %1510, %v1469
    %v1512 = vpop.permute.xlu0 %1511
    %v1514 = vmul.f32 %v1200, %v1500
    %v1515 = vmul.f32 %v1201, %v1500
    %v1516 = vmul.f32 %v1204, %v1504
    %v1517 = vmul.f32 %v1205, %v1504
    %v1518 = vmul.f32 %v1208, %v1508
    %v1519 = vmul.f32 %v1209, %v1508
    %v1520 = vmul.f32 %v1212, %v1512
    %v1521 = vmul.f32 %v1213, %v1512
    %v1522 = vadd.f32 %v1490, 3.0
    %v1523 = vadd.f32 %v1491, 3.0
    %v1524 = vadd.f32 %v1514, 3.0
    %v1525 = vadd.f32 %v1515, 3.0
    %v1526 = vadd.f32 %v1492, 3.0
    %v1527 = vadd.f32 %v1493, 3.0
    %v1528 = vadd.f32 %v1516, 3.0
    %v1529 = vadd.f32 %v1517, 3.0
    %v1530 = vadd.f32 %v1494, 3.0
    %v1531 = vadd.f32 %v1495, 3.0
    %v1532 = vadd.f32 %v1518, 3.0
    %v1533 = vadd.f32 %v1519, 3.0
    %v1534 = vadd.f32 %v1496, 3.0
    %v1535 = vadd.f32 %v1497, 3.0
    %v1536 = vadd.f32 %v1520, 3.0
    %v1537 = vadd.f32 %v1521, 3.0
    %v1538 = vmax.f32 %v1522, 0.0
    %v1539 = vmax.f32 %v1523, 0.0
    %v1540 = vmax.f32 %v1524, 0.0
    %v1541 = vmax.f32 %v1525, 0.0
    %v1542 = vmax.f32 %v1526, 0.0
    %v1543 = vmax.f32 %v1527, 0.0
    %v1544 = vmax.f32 %v1528, 0.0
    %v1545 = vmax.f32 %v1529, 0.0
    %v1546 = vmax.f32 %v1530, 0.0
    %v1547 = vmax.f32 %v1531, 0.0
    %v1548 = vmax.f32 %v1532, 0.0
    %v1549 = vmax.f32 %v1533, 0.0
    %v1550 = vmax.f32 %v1534, 0.0
    %v1551 = vmax.f32 %v1535, 0.0
    %v1552 = vmax.f32 %v1536, 0.0
    %v1553 = vmax.f32 %v1537, 0.0
    %v1554 = vmin.f32 %v1538, 6.0
    %v1555 = vmin.f32 %v1539, 6.0
    %v1556 = vmin.f32 %v1540, 6.0
    %v1557 = vmin.f32 %v1541, 6.0
    %v1558 = vmin.f32 %v1542, 6.0
    %v1559 = vmin.f32 %v1543, 6.0
    %v1560 = vmin.f32 %v1544, 6.0
    %v1561 = vmin.f32 %v1545, 6.0
    %v1562 = vmin.f32 %v1546, 6.0
    %v1563 = vmin.f32 %v1547, 6.0
    %v1564 = vmin.f32 %v1548, 6.0
    %v1565 = vmin.f32 %v1549, 6.0
    %v1566 = vmin.f32 %v1550, 6.0
    %v1567 = vmin.f32 %v1551, 6.0
    %v1568 = vmin.f32 %v1552, 6.0
    %v1569 = vmin.f32 %v1553, 6.0
    %v1570 = vmul.f32 %v1554, 0.16666667
    %v1571 = vmul.f32 %v1555, 0.16666667
    %v1572 = vmul.f32 %v1556, 0.16666667
    %v1573 = vmul.f32 %v1557, 0.16666667
    %v1574 = vmul.f32 %v1558, 0.16666667
    %v1575 = vmul.f32 %v1559, 0.16666667
    %v1576 = vmul.f32 %v1560, 0.16666667
    %v1577 = vmul.f32 %v1561, 0.16666667
    %v1578 = vmul.f32 %v1562, 0.16666667
    %v1579 = vmul.f32 %v1563, 0.16666667
    %v1580 = vmul.f32 %v1564, 0.16666667
    %v1581 = vmul.f32 %v1565, 0.16666667
    %v1582 = vmul.f32 %v1566, 0.16666667
    %v1583 = vmul.f32 %v1567, 0.16666667
    %v1584 = vmul.f32 %v1568, 0.16666667
    %v1585 = vmul.f32 %v1569, 0.16666667
    %v1586 = vmul.f32 %v1490, %v1570
    %v1587 = vmul.f32 %v1491, %v1571
    %v1588 = vmul.f32 %v1514, %v1572
    %v1589 = vmul.f32 %v1515, %v1573
    %v1590 = vmul.f32 %v1492, %v1574
    %v1591 = vmul.f32 %v1493, %v1575
    %v1592 = vmul.f32 %v1516, %v1576
    %v1593 = vmul.f32 %v1517, %v1577
    %v1594 = vmul.f32 %v1494, %v1578
    %v1595 = vmul.f32 %v1495, %v1579
    %v1596 = vmul.f32 %v1518, %v1580
    %v1597 = vmul.f32 %v1519, %v1581
    %v1598 = vmul.f32 %v1496, %v1582
    %v1599 = vmul.f32 %v1497, %v1583
    %v1600 = vmul.f32 %v1520, %v1584
    %v1601 = vmul.f32 %v1521, %v1585
    %v1602 = vld [vmem:[%s7] sm:$0xff]
    %v1603 = vld [vmem:[%s8] sm:$0xff]
    %1605 = vset.pattern.permute.xlu0 0
    %1606 = vperm.xlu0 %1605, %v1603
    %v1607 = vpop.permute.xlu0 %1606
    %v1610 = vsel %vm1258, %v1602, 0
    %1612 = vmatprep.subr.mxu0 %v1587
    %1613 = vmatpush1.msra.mxu0 %v1586
    %1614 = vmatprep.subr.mxu0 %v1591
    %1615 = vmatpush1.msra.mxu0 %v1590
    %1616 = vmatprep.subr.mxu0 %v1595
    %1617 = vmatpush1.msra.mxu0 %v1594
    %1618 = vmatprep.subr.mxu0 %v1599
    %1619 = vmatpush1.msra.mxu0 %v1598
    %1620 = vmatprep.subr.mxu0 0.0
    %1621 = vmatpush1.msra.mxu0 0.0
    %1622 = vmatprep.subr.mxu0 0.0
    %1623 = vmatpush1.msra.mxu0 0.0
    %1624 = vmatprep.subr.mxu0 0.0
    %1625 = vmatpush1.msra.mxu0 0.0
    %1626 = vmatprep.subr.mxu0 0.0
    %1627 = vmatpush1.msra.mxu0 0.0
    %1628 = vmatprep.subr.mxu0 0.0
    %1629 = vmatpush1.msra.mxu0 0.0
    %1630 = vmatprep.subr.mxu0 0.0
    %1631 = vmatpush1.msra.mxu0 0.0
    %1632 = vmatprep.subr.mxu0 0.0
    %1633 = vmatpush1.msra.mxu0 0.0
    %1634 = vmatprep.subr.mxu0 0.0
    %1635 = vmatpush1.msra.mxu0 0.0
    %1636 = vmatprep.subr.mxu0 0.0
    %1637 = vmatpush1.msra.mxu0 0.0
    %1638 = vmatprep.subr.mxu0 0.0
    %1639 = vmatpush1.msra.mxu0 0.0
    %1640 = vmatprep.subr.mxu0 0.0
    %1641 = vmatpush1.msra.mxu0 0.0
    %1642 = vmatprep.subr.mxu0 0.0
    %1643 = vmatpush1.msra.mxu0 0.0
    %1644 = vmatprep.subr.mxu0 0.0
    %1645 = vmatpush1.msra.mxu0 0.0
    %1646 = vmatprep.subr.mxu0 0.0
    %1647 = vmatpush1.msra.mxu0 0.0
    %1648 = vmatprep.subr.mxu0 0.0
    %1649 = vmatpush1.msra.mxu0 0.0
    %1650 = vmatprep.subr.mxu0 0.0
    %1651 = vmatpush1.msra.mxu0 0.0
    %1652 = vmatprep.subr.mxu0 0.0
    %1653 = vmatpush1.msra.mxu0 0.0
    %1654 = vmatprep.subr.mxu0 0.0
    %1655 = vmatpush1.msra.mxu0 0.0
    %1656 = vmatprep.subr.mxu0 0.0
    %1657 = vmatpush1.msra.mxu0 0.0
    %1658 = vmatprep.subr.mxu0 0.0
    %1659 = vmatpush1.msra.mxu0 0.0
    %1660 = vmatprep.subr.mxu0 0.0
    %1661 = vmatpush1.msra.mxu0 0.0
    %1662 = vmatprep.subr.mxu0 0.0
    %1663 = vmatpush1.msra.mxu0 0.0
    %1664 = vmatprep.subr.mxu0 0.0
    %1665 = vmatpush1.msra.mxu0 0.0
    %1666 = vmatprep.subr.mxu0 0.0
    %1667 = vmatpush1.msra.mxu0 0.0
    %1668 = vmatprep.subr.mxu0 0.0
    %1669 = vmatpush1.msra.mxu0 0.0
    %1670 = vmatprep.subr.mxu0 0.0
    %1671 = vmatpush1.msra.mxu0 0.0
    %1672 = vmatprep.subr.mxu0 0.0
    %1673 = vmatpush1.msra.mxu0 0.0
    %1674 = vmatprep.subr.mxu0 0.0
    %1675 = vmatpush1.msra.mxu0 0.0
    %1676 = vmatprep.mubr.f32.mxu0 0.0
    %1677 = vmatmul.mubr.f32.gmra.mrb[0].mxu0 %v1610
    %v1678 = vpop.f32.mrb[0].mxu0
    %v1679 = vadd.f32 %v1607, %v1678
    %v1680 = vpop.f32.mrb[0].mxu0
    %v1681 = vadd.f32 %v1607, %v1680
    %1682 = vdwg.mxu0
    %1683 = vmatprep.subr.mxu0 %v1589
    %1684 = vmatpush1.msra.mxu0 %v1588
    %1685 = vmatprep.subr.mxu0 %v1593
    %1686 = vmatpush1.msra.mxu0 %v1592
    %1687 = vmatprep.subr.mxu0 %v1597
    %1688 = vmatpush1.msra.mxu0 %v1596
    %1689 = vmatprep.subr.mxu0 %v1601
    %1690 = vmatpush1.msra.mxu0 %v1600
    %1691 = vmatprep.subr.mxu0 0.0
    %1692 = vmatpush1.msra.mxu0 0.0
    %1693 = vmatprep.subr.mxu0 0.0
    %1694 = vmatpush1.msra.mxu0 0.0
    %1695 = vmatprep.subr.mxu0 0.0
    %1696 = vmatpush1.msra.mxu0 0.0
    %1697 = vmatprep.subr.mxu0 0.0
    %1698 = vmatpush1.msra.mxu0 0.0
    %1699 = vmatprep.subr.mxu0 0.0
    %1700 = vmatpush1.msra.mxu0 0.0
    %1701 = vmatprep.subr.mxu0 0.0
    %1702 = vmatpush1.msra.mxu0 0.0
    %1703 = vmatprep.subr.mxu0 0.0
    %1704 = vmatpush1.msra.mxu0 0.0
    %1705 = vmatprep.subr.mxu0 0.0
    %1706 = vmatpush1.msra.mxu0 0.0
    %1707 = vmatprep.subr.mxu0 0.0
    %1708 = vmatpush1.msra.mxu0 0.0
    %1709 = vmatprep.subr.mxu0 0.0
    %1710 = vmatpush1.msra.mxu0 0.0
    %1711 = vmatprep.subr.mxu0 0.0
    %1712 = vmatpush1.msra.mxu0 0.0
    %1713 = vmatprep.subr.mxu0 0.0
    %1714 = vmatpush1.msra.mxu0 0.0
    %1715 = vmatprep.subr.mxu0 0.0
    %1716 = vmatpush1.msra.mxu0 0.0
    %1717 = vmatprep.subr.mxu0 0.0
    %1718 = vmatpush1.msra.mxu0 0.0
    %1719 = vmatprep.subr.mxu0 0.0
    %1720 = vmatpush1.msra.mxu0 0.0
    %1721 = vmatprep.subr.mxu0 0.0
    %1722 = vmatpush1.msra.mxu0 0.0
    %1723 = vmatprep.subr.mxu0 0.0
    %1724 = vmatpush1.msra.mxu0 0.0
    %1725 = vmatprep.subr.mxu0 0.0
    %1726 = vmatpush1.msra.mxu0 0.0
    %1727 = vmatprep.subr.mxu0 0.0
    %1728 = vmatpush1.msra.mxu0 0.0
    %1729 = vmatprep.subr.mxu0 0.0
    %1730 = vmatpush1.msra.mxu0 0.0
    %1731 = vmatprep.subr.mxu0 0.0
    %1732 = vmatpush1.msra.mxu0 0.0
    %1733 = vmatprep.subr.mxu0 0.0
    %1734 = vmatpush1.msra.mxu0 0.0
    %1735 = vmatprep.subr.mxu0 0.0
    %1736 = vmatpush1.msra.mxu0 0.0
    %1737 = vmatprep.subr.mxu0 0.0
    %1738 = vmatpush1.msra.mxu0 0.0
    %1739 = vmatprep.subr.mxu0 0.0
    %1740 = vmatpush1.msra.mxu0 0.0
    %1741 = vmatprep.subr.mxu0 0.0
    %1742 = vmatpush1.msra.mxu0 0.0
    %1743 = vmatprep.subr.mxu0 0.0
    %1744 = vmatpush1.msra.mxu0 0.0
    %1745 = vmatprep.subr.mxu0 0.0
    %1746 = vmatpush1.msra.mxu0 0.0
    %1747 = vmatprep.mubr.f32.mxu0 0.0
    %1748 = vmatmul.mubr.f32.gmra.mrb[0].mxu0 %v1610
    %v1749 = vpop.f32.mrb[0].mxu0
    %v1750 = vadd.f32 %v1607, %v1749
    %v1751 = vpop.f32.mrb[0].mxu0
    %v1752 = vadd.f32 %v1607, %v1751
    %1753 = vdwg.mxu0
    %v1754 = vadd.f32 %v1679, %v47
    %v1755 = vadd.f32 %v1681, %v48
    %v1756 = vadd.f32 %v1750, %v49
    %v1757 = vadd.f32 %v1752, %v50
    %1758 = vst [vmem:[#allocation5] sm:$0xff] %v1754
    %1759 = vst [vmem:[#allocation5 + $0x8] sm:$0xff] %v1755
    %1760 = vst [vmem:[#allocation5 + $0x10] sm:$0xff] %v1756
    %1761 = vst [vmem:[#allocation5 + $0x18] sm:$0xff] %v1757
    // Predicated region
    $region42: #{tpu_custom_call.1} parent=1 // pred_check
      _
    $region43: #{tpu_custom_call.1} parent=1 // pred_check_branch
      %1763 = sbr.rel (0) target = $region45
    $region44: #{tpu_custom_call.1} parent=1 // pred_region
      %s1765 = ssub.s32 512, 512
      %1766 = vsyncadd [#allocation4], %s1765
      %s1768 = sshll.u32 [#allocation5], 4
      %s1769 = int_to_ptr.vmem [resolvable:$true] %s1768
      %1771 = dma.vmem_to_hbm [thread:$0]  %s1769, 512, %s9, [#allocation4]
    $region45: #{tpu_custom_call.1} parent=1 // pred_fallthru
      _
    // Predicated region
    $region46: #{tpu_custom_call.1} parent=1 // pred_check
      _
    $region47: #{tpu_custom_call.1} parent=1 // pred_check_branch
      %1773 = sbr.rel (0) target = $region49
    $region48: #{tpu_custom_call.1} parent=1 // pred_region
      %1774 = dma.done [#allocation4], 512
    $region49: #{tpu_custom_call.1} parent=1 // pred_fallthru
      _
    %1775 = vsyncpa [#allocation3], 1
    %1776 = vsyncpa [#allocation4], 1

</llo_original>
